<compile_context>
chip_gen: v5e
topology: v5e:2x2
jax: 0.10.0
libtpu: 0.0.40
codegen_flags: <defaults>
</compile_context>

<pallas_src>
import jax
import jax.numpy as jnp
from jax import lax
from jax.experimental import pallas as pl
from jax.experimental.pallas import tpu as pltpu


def _make_self_attn_kernel(mm_dtype, exp_dtype, tq, *, separate_residual, key_bias):
    """Build the per-(batch, query-tile) kernel body.

    mm_dtype: operand dtype for the large MXU matmuls (f32 or bf16); accumulation
              is always f32.
    exp_dtype: dtype for the softmax exp (bf16 targets the v6e/v7x EUP fast path).
    separate_residual: True when x is stored in a lossy matmul dtype, in which case
              a small exact-residual tile is passed as an extra input.
    key_bias: True when N was padded; a (1, N) bias row masks padded keys.
    """
    f32 = jnp.float32
    exp_is_f32 = jnp.dtype(exp_dtype) == jnp.dtype(jnp.float32)

    def kernel(*refs):
        it = iter(refs)
        x_ref = next(it)                                    # (1, C, N)  mm-storage dtype
        xr_ref = next(it) if separate_residual else None    # (1, C, TQ) residual dtype
        kb_ref = next(it) if key_bias else None             # (1, N)     f32 key bias
        mt_ref = next(it)                                   # (C, C)     M^T = Wk^T Wq
        u_ref = next(it)                                    # (C, 1)     Wk^T bq
        wv_ref = next(it)                                   # (C, C)     value weights
        bv_ref = next(it)                                   # (C, 1)     value bias
        gamma_ref = next(it)                                # (1,)       SMEM scalar
        out_ref = next(it)                                  # (1, C, TQ)
        v_scr = next(it)                                    # (C, N)     mm_dtype scratch

        qi = pl.program_id(1)

        # Per-batch-element precompute: V = Wv x + bv, reused by every query tile.
        @pl.when(qi == 0)
        def _():
            v = (jnp.dot(wv_ref[...], x_ref[0], preferred_element_type=f32)
                 + bv_ref[...])                                       # (C, N) f32
            v_scr[...] = v.astype(v_scr.dtype)

        # Query columns are already resident in the full (C, N) x block.
        start = pl.multiple_of(qi * tq, tq)
        xq = x_ref[0, :, pl.ds(start, tq)]                            # (C, TQ)

        # qt[:, i] = M^T x_i + u  (the only q/k-bias term that survives softmax).
        qt = jnp.dot(mt_ref[...], xq, preferred_element_type=f32) + u_ref[...]
        qp_t = qt.T.astype(mm_dtype)                                  # (TQ, C)

        # energy[i, j] = (M^T x_i + u) . x_j  -- NN matmul, contracts C.
        energy = jnp.dot(qp_t, x_ref[0], preferred_element_type=f32)  # (TQ, N)
        if key_bias:
            energy = energy + kb_ref[...]

        # Row softmax (numerically stable); reciprocal on the otherwise-idle EUP.
        e_max = jnp.max(energy, axis=-1, keepdims=True)
        s = energy - e_max
        if exp_is_f32:
            p = jnp.exp(s)
            denom = jnp.sum(p, axis=-1, keepdims=True)
            attn = (p * pl.reciprocal(denom, approx=True)).astype(mm_dtype)
        else:
            p = jnp.exp(s.astype(exp_dtype))
            denom = jnp.sum(p.astype(f32), axis=-1, keepdims=True)
            attn = (p * pl.reciprocal(denom, approx=True).astype(exp_dtype)
                    ).astype(mm_dtype)

        # out[c, i] = sum_j V[c, j] * attn[i, j]  -- NT matmul (contract last dims).
        attn_out = lax.dot_general(
            v_scr[...], attn,
            dimension_numbers=(((1,), (1,)), ((), ())),
            preferred_element_type=f32)                               # (C, TQ)

        # Residual add (lane-dense store).
        res = xr_ref[0] if separate_residual else xq
        out_ref[0] = (gamma_ref[0] * attn_out + res.astype(f32)).astype(out_ref.dtype)

    return kernel


def _tpu_vmem_capacity_bytes() -> int:
    """Physical VMEM per core (128 MiB v5e/v6e, 64 MiB v7x); conservative fallback."""
    try:
        return int(pltpu.get_tpu_info().vmem_capacity_bytes)
    except Exception:
        return 64 * 1024 * 1024


def _vmem_bytes_estimate(c, n_pad, tq, x_bytes, mm_bytes, res_bytes, out_bytes,
                         exp_bytes):
    """Estimate the live VMEM working set for one grid step (actual dtypes)."""
    lane = 128
    return (
        c * n_pad * x_bytes                       # full-x block (single-buffered)
        + c * n_pad * mm_bytes                    # V scratch
        + 3 * tq * n_pad * 4                      # energy / exp / normalize temporaries
        + tq * n_pad * max(mm_bytes, exp_bytes)   # attn copy in matmul dtype
        + 2 * c * tq * out_bytes                  # output block (double-buffered)
        + 2 * c * tq * res_bytes                  # residual block (0 if read from x)
        + 4 * c * c * mm_bytes                    # M^T and Wv blocks (double-buffered)
        + 4 * c * lane * 4                        # u, bv (lane-padded, double-buffered)
        + 2 * tq * max(c, lane) * 4               # qt / transposed-query temporaries
        + 4 * lane * n_pad                        # key-bias row + misc row temporaries
    )


def _choose_tiling(c, n, x_bytes, mm_bytes, res_bytes, out_bytes, exp_bytes):
    """Pad N to a multiple of 128 and pick the largest query tile fitting VMEM."""
    n_pad = ((n + 127) // 128) * 128
    cap = _tpu_vmem_capacity_bytes()
    budget = int(cap * 0.70)
    tq = 128
    for cand in (1024, 512, 256, 128):
        if n_pad % cand:
            continue
        if _vmem_bytes_estimate(c, n_pad, cand, x_bytes, mm_bytes, res_bytes,
                                out_bytes, exp_bytes) <= budget:
            tq = cand
            break
    est = _vmem_bytes_estimate(c, n_pad, tq, x_bytes, mm_bytes, res_bytes,
                               out_bytes, exp_bytes)
    vmem_limit = min(max(int(est * 1.3) + (2 << 20), 16 << 20), int(cap * 0.9))
    return tq, n_pad, vmem_limit


def self_attn_pallas(x_nchw, wq, bq, wk, bk, wv, bv, gamma, *,
                     use_bf16_matmul=False, use_bf16_exp=False):
    """SAGAN Self_Attn forward. x_nchw: (B, C, W, H) -> (B, C, W, H).

    wq, wk: (C//attn_div, C); bq, bk: (C//attn_div,); wv: (C, C); bv: (C,);
    gamma: scalar.

    use_bf16_matmul: store x / folded weights / V once as bf16 MXU operands with
      f32 accumulation.  Recommended on every TPU generation (v5e's MXU is natively
      bf16; on v6e/v7x it also halves the x DMA and V scratch); costs ~1e-2
      relative accuracy.
    use_bf16_exp: run the softmax exp in bf16 (EUP fast path on v6e/v7x; keep
      False on v5e, whose EUP has no bf16 mode).
    Note: bk only contributes key-independent terms and cancels in the row softmax.
    """
    B, C, W, H = x_nchw.shape
    N = W * H
    f32 = jnp.float32
    mm_dtype = jnp.bfloat16 if use_bf16_matmul else f32
    exp_dtype = jnp.bfloat16 if use_bf16_exp else f32
    out_dtype = x_nchw.dtype
    separate_residual = (jnp.dtype(mm_dtype).itemsize
                         < jnp.dtype(out_dtype).itemsize)

    mm_bytes = jnp.dtype(mm_dtype).itemsize
    res_bytes = jnp.dtype(out_dtype).itemsize if separate_residual else 0
    TQ, N_pad, vmem_limit = _choose_tiling(
        C, N, mm_bytes, mm_bytes, res_bytes,
        jnp.dtype(out_dtype).itemsize, jnp.dtype(exp_dtype).itemsize)
    pad = N_pad - N
    n_q = N_pad // TQ

    # NCHW -> (B, C, N): same memory order as torch's .view(B, C, W*H); already the
    # lane-dense layout the kernel wants -- no transposes of x or of the output.
    x_bcn = x_nchw.reshape(B, C, N)
    if pad:
        x_bcn = jnp.pad(x_bcn, ((0, 0), (0, 0), (0, pad)))
    x_mm = x_bcn.astype(mm_dtype)   # matmul-operand storage: cast once, not per step.

    # Fold the q/k 1x1 convs: only M^T = Wk^T Wq and u = Wk^T bq survive the softmax.
    mt = (wk.astype(f32).T @ wq.astype(f32)).astype(mm_dtype)   # (C, C)
    u = (bq.astype(f32) @ wk.astype(f32)).reshape(C, 1)         # (C, 1)
    wv2 = wv.astype(mm_dtype)                                   # (C, C)
    bv2 = bv.astype(f32).reshape(C, 1)                          # (C, 1)
    g1 = jnp.asarray(gamma, f32).reshape(1)                     # (1,) -> SMEM

    kernel = _make_self_attn_kernel(mm_dtype, exp_dtype, TQ,
                                    separate_residual=separate_residual,
                                    key_bias=pad > 0)

    # Full x block: index only changes with b -> single-buffer it.
    in_specs = [pl.BlockSpec((1, C, N_pad), lambda b, q: (b, 0, 0),
                             pipeline_mode=pl.Buffered(1))]
    operands = [x_mm]
    if separate_residual:
        in_specs.append(pl.BlockSpec((1, C, TQ), lambda b, q: (b, 0, q)))
        operands.append(x_bcn)                                  # exact residual tiles
    if pad > 0:
        kb = jnp.concatenate([jnp.zeros((1, N), f32),
                              jnp.full((1, pad), -1e30, f32)], axis=1)
        in_specs.append(pl.BlockSpec((1, N_pad), lambda b, q: (0, 0)))
        operands.append(kb)
    in_specs += [
        pl.BlockSpec((C, C), lambda b, q: (0, 0)),          # M^T = Wk^T Wq
        pl.BlockSpec((C, 1), lambda b, q: (0, 0)),          # u = Wk^T bq
        pl.BlockSpec((C, C), lambda b, q: (0, 0)),          # Wv
        pl.BlockSpec((C, 1), lambda b, q: (0, 0)),          # bv
        pl.BlockSpec(memory_space=pltpu.MemorySpace.SMEM),  # gamma (scalar)
    ]
    operands += [mt, u, wv2, bv2, g1]

    out_bcn = pl.pallas_call(
        kernel,
        out_shape=jax.ShapeDtypeStruct((B, C, N_pad), out_dtype),
        grid_spec=pltpu.PrefetchScalarGridSpec(
            num_scalar_prefetch=0,
            grid=(B, n_q),
            in_specs=in_specs,
            out_specs=pl.BlockSpec((1, C, TQ), lambda b, q: (b, 0, q)),
            scratch_shapes=[pltpu.VMEM((C, N_pad), mm_dtype)],   # V = Wv x + bv
        ),
        compiler_params=pltpu.CompilerParams(
            # TODO(synk): to use v7x's second TensorCore when B == 1, hoist the
            # pl.when(qi == 0) V precompute out of the kernel and mark the q axis
            # "parallel"; it is kept "arbitrary" here so v_scr init stays correct.
            dimension_semantics=("parallel", "arbitrary"),
            vmem_limit_bytes=vmem_limit,
        ),
    )(*operands)

    if pad:
        out_bcn = out_bcn[:, :, :N]
    return out_bcn.reshape(B, C, W, H)


def self_attn_reference(x_nchw, wq, bq, wk, bk, wv, bv, gamma):
    """Pure-JAX reference mirroring the PyTorch forward (for verification)."""
    B, C, W, H = x_nchw.shape
    N = W * H
    xf = x_nchw.reshape(B, C, N)                                   # (B, C, N)
    q = jnp.einsum('oc,bcn->bon', wq, xf) + bq[None, :, None]      # (B, Cq, N)
    k = jnp.einsum('oc,bcn->bon', wk, xf) + bk[None, :, None]      # (B, Cq, N)
    v = jnp.einsum('oc,bcn->bon', wv, xf) + bv[None, :, None]      # (B, C, N)
    energy = jnp.einsum('bci,bcj->bij', q, k)                      # (B, N, N)
    attn = jax.nn.softmax(energy, axis=-1)
    out = jnp.einsum('bcj,bij->bci', v, attn)                      # (B, C, N)
    out = out.reshape(B, C, W, H)
    return gamma * out + x_nchw


if __name__ == "__main__":
    B, C, W, H = 2, 16, 16, 16            # in_dim=16, attn_div=8 -> Cq=2, N=256
    attn_div = 8
    Cq = C // attn_div

    key = jax.random.PRNGKey(0)
    kx, k1, k2, k3, k4, k5, k6 = jax.random.split(key, 7)

    x = jax.random.normal(kx, (B, C, W, H), dtype=jnp.float32)
    wq = jax.random.normal(k1, (Cq, C), dtype=jnp.float32) * 0.1
    bq = jax.random.normal(k2, (Cq,), dtype=jnp.float32) * 0.1
    wk = jax.random.normal(k3, (Cq, C), dtype=jnp.float32) * 0.1
    bk = jax.random.normal(k4, (Cq,), dtype=jnp.float32) * 0.1
    wv = jax.random.normal(k5, (C, C), dtype=jnp.float32) * 0.1
    bv = jax.random.normal(k6, (C,), dtype=jnp.float32) * 0.1
    # nn.Parameter(torch.zeros(1)) would make out == x; use a nonzero gamma so the
    # attention path is actually exercised.
    gamma = jnp.float32(0.5)

    ref = self_attn_reference(x, wq, bq, wk, bk, wv, bv, gamma)

    # f32 MXU operands (safe on every generation).  Tolerance is 2e-3 solely
    # because of the EUP approximate reciprocal in the softmax.
    out = jax.block_until_ready(
        self_attn_pallas(x, wq, bq, wk, bk, wv, bv, gamma))
    assert out.shape == (B, C, W, H)
    assert jnp.allclose(out, ref, atol=2e-3, rtol=2e-3), \
        "f32 kernel mismatch vs reference"

    # bf16 MXU operands / f32 accumulation (recommended fast path on all
    # generations; loose bound only covers bf16 operand rounding).
    out_bf16 = jax.block_until_ready(
        self_attn_pallas(x, wq, bq, wk, bk, wv, bv, gamma, use_bf16_matmul=True))
    assert jnp.allclose(out_bf16, ref, atol=3e-2, rtol=3e-2), \
        "bf16 kernel mismatch vs reference"

    print("KERNEL_OK")
</pallas_src>

<mosaic_0001>
module attributes {stable_mosaic.version = 11 : i64} {
  func.func @kernel(%arg0: i32, %arg1: i32, %arg2: memref<1x16x256xf32, #tpu.memory_space<vmem>>, %arg3: memref<16x16xf32, #tpu.memory_space<vmem>>, %arg4: memref<16x1xf32, #tpu.memory_space<vmem>>, %arg5: memref<16x16xf32, #tpu.memory_space<vmem>>, %arg6: memref<16x1xf32, #tpu.memory_space<vmem>>, %arg7: memref<1xf32, #tpu.memory_space<smem>>, %arg8: memref<1x16x256xf32, #tpu.memory_space<vmem>>, %arg9: memref<16x256xf32, #tpu.memory_space<vmem>>) attributes {dimension_semantics = [#tpu.dimension_semantics<parallel>, #tpu.dimension_semantics<arbitrary>], iteration_bounds = array<i64: 2, 1>, scalar_prefetch = 0 : i64, scratch_operands = 1 : i64, tpu.core_type = #tpu.core_type<tc>, window_params = [{pipeline_mode = #tpu.pipeline_mode<synchronous>, transform_indices = @transform_0, window_bounds = array<i64: 1, 16, 256>}, {pipeline_mode = #tpu.pipeline_mode<synchronous>, transform_indices = @transform_1, window_bounds = array<i64: 16, 16>}, {pipeline_mode = #tpu.pipeline_mode<synchronous>, transform_indices = @transform_2, window_bounds = array<i64: 16, 1>}, {pipeline_mode = #tpu.pipeline_mode<synchronous>, transform_indices = @transform_3, window_bounds = array<i64: 16, 16>}, {pipeline_mode = #tpu.pipeline_mode<synchronous>, transform_indices = @transform_4, window_bounds = array<i64: 16, 1>}, {transform_indices = @transform_5, window_bounds = array<i64: 1>}, {transform_indices = @transform_6, window_bounds = array<i64: 1, 16, 256>}]} {
    %c0_i32 = arith.constant 0 : i32
    %0 = arith.cmpi eq, %arg1, %c0_i32 : i32
    %1 = arith.extui %0 : i1 to i32
    %c0_i32_0 = arith.constant 0 : i32
    %2 = arith.cmpi ne, %1, %c0_i32_0 : i32
    scf.if %2 {
      %c0_19 = arith.constant 0 : index
      %c0_20 = arith.constant 0 : index
      %36 = vector.load %arg5[%c0_19, %c0_20] : memref<16x16xf32, #tpu.memory_space<vmem>>, vector<16x16xf32>
      %c0_21 = arith.constant 0 : index
      %c0_22 = arith.constant 0 : index
      %c0_23 = arith.constant 0 : index
      %37 = vector.load %arg2[%c0_21, %c0_22, %c0_23] : memref<1x16x256xf32, #tpu.memory_space<vmem>>, vector<1x16x256xf32>
      %38 = vector.shape_cast %37 : vector<1x16x256xf32> to vector<16x256xf32>
      %cst_24 = arith.constant dense<0.000000e+00> : vector<16x256xf32>
      %39 = tpu.matmul %36, %38, %cst_24 {dimension_numbers = #tpu.dot_dimension_numbers<[1], [0], [0], [1], [0, 0, 1, 1], [], []>} : vector<16x16xf32>, vector<16x256xf32>, vector<16x256xf32> -> vector<16x256xf32>
      %c0_25 = arith.constant 0 : index
      %c0_26 = arith.constant 0 : index
      %40 = vector.load %arg6[%c0_25, %c0_26] : memref<16x1xf32, #tpu.memory_space<vmem>>, vector<16x1xf32>
      %41 = vector.broadcast %40 : vector<16x1xf32> to vector<16x256xf32>
      %42 = arith.addf %39, %41 : vector<16x256xf32>
      %c0_27 = arith.constant 0 : index
      %c0_28 = arith.constant 0 : index
      %43 = vector.load %arg9[%c0_27, %c0_28] : memref<16x256xf32, #tpu.memory_space<vmem>>, vector<16x256xf32>
      tpu.vector_store %arg9[%c0_27, %c0_28], %42 {strides = array<i32>} : memref<16x256xf32, #tpu.memory_space<vmem>>, vector<16x256xf32>,
    } else {
    }
    %c256_i32 = arith.constant 256 : i32
    %3 = arith.muli %arg1, %c256_i32 : i32
    %4 = tpu.assume_multiple %3, 256 : i32
    %c0 = arith.constant 0 : index
    %c0_1 = arith.constant 0 : index
    %5 = arith.index_cast %4 : i32 to index
    %6 = vector.load %arg2[%c0, %c0_1, %5] : memref<1x16x256xf32, #tpu.memory_space<vmem>>, vector<1x16x256xf32>
    %7 = vector.shape_cast %6 : vector<1x16x256xf32> to vector<16x256xf32>
    %c0_2 = arith.constant 0 : index
    %c0_3 = arith.constant 0 : index
    %8 = vector.load %arg3[%c0_2, %c0_3] : memref<16x16xf32, #tpu.memory_space<vmem>>, vector<16x16xf32>
    %cst = arith.constant dense<0.000000e+00> : vector<16x256xf32>
    %9 = tpu.matmul %8, %7, %cst {dimension_numbers = #tpu.dot_dimension_numbers<[1], [0], [0], [1], [0, 0, 1, 1], [], []>} : vector<16x16xf32>, vector<16x256xf32>, vector<16x256xf32> -> vector<16x256xf32>
    %c0_4 = arith.constant 0 : index
    %c0_5 = arith.constant 0 : index
    %10 = vector.load %arg4[%c0_4, %c0_5] : memref<16x1xf32, #tpu.memory_space<vmem>>, vector<16x1xf32>
    %11 = vector.broadcast %10 : vector<16x1xf32> to vector<16x256xf32>
    %12 = arith.addf %9, %11 : vector<16x256xf32>
    %13 = tpu.transpose %12, [1, 0] : vector<16x256xf32> -> vector<256x16xf32>
    %c0_6 = arith.constant 0 : index
    %c0_7 = arith.constant 0 : index
    %c0_8 = arith.constant 0 : index
    %14 = vector.load %arg2[%c0_6, %c0_7, %c0_8] : memref<1x16x256xf32, #tpu.memory_space<vmem>>, vector<1x16x256xf32>
    %15 = vector.shape_cast %14 : vector<1x16x256xf32> to vector<16x256xf32>
    %cst_9 = arith.constant dense<0.000000e+00> : vector<256x256xf32>
    %16 = tpu.matmul %13, %15, %cst_9 {dimension_numbers = #tpu.dot_dimension_numbers<[1], [0], [0], [1], [0, 0, 1, 1], [], []>} : vector<256x16xf32>, vector<16x256xf32>, vector<256x256xf32> -> vector<256x256xf32>
    %cst_10 = arith.constant dense<0xFF800000> : vector<256xf32>
    %17 = vector.multi_reduction <maximumf>, %16, %cst_10 [1] : vector<256x256xf32> to vector<256xf32>
    %18 = vector.shape_cast %17 : vector<256xf32> to vector<256x1xf32>
    %19 = vector.broadcast %18 : vector<256x1xf32> to vector<256x256xf32>
    %20 = arith.subf %16, %19 : vector<256x256xf32>
    %21 = math.exp %20 : vector<256x256xf32>
    %cst_11 = arith.constant dense<0.000000e+00> : vector<256xf32>
    %22 = vector.multi_reduction <add>, %21, %cst_11 [1] : vector<256x256xf32> to vector<256xf32>
    %23 = vector.shape_cast %22 : vector<256xf32> to vector<256x1xf32>
    %24 = tpu.reciprocal %23 {approx = true} : vector<256x1xf32> -> vector<256x1xf32>
    %25 = vector.broadcast %24 : vector<256x1xf32> to vector<256x256xf32>
    %26 = arith.mulf %21, %25 : vector<256x256xf32>
    %c0_12 = arith.constant 0 : index
    %c0_13 = arith.constant 0 : index
    %27 = vector.load %arg9[%c0_12, %c0_13] : memref<16x256xf32, #tpu.memory_space<vmem>>, vector<16x256xf32>
    %cst_14 = arith.constant dense<0.000000e+00> : vector<16x256xf32>
    %28 = tpu.matmul %27, %26, %cst_14 {dimension_numbers = #tpu.dot_dimension_numbers<[1], [1], [0], [0], [0, 0, 1, 0], [], []>} : vector<16x256xf32>, vector<256x256xf32>, vector<16x256xf32> -> vector<16x256xf32>
    %c0_15 = arith.constant 0 : index
    %29 = memref.load %arg7[%c0_15] : memref<1xf32, #tpu.memory_space<smem>>
    %30 = vector.broadcast %29 : f32 to vector<16x256xf32>
    %31 = arith.mulf %30, %28 : vector<16x256xf32>
    %32 = arith.addf %31, %7 : vector<16x256xf32>
    %c0_16 = arith.constant 0 : index
    %c0_17 = arith.constant 0 : index
    %c0_18 = arith.constant 0 : index
    %33 = vector.load %arg8[%c0_16, %c0_17, %c0_18] : memref<1x16x256xf32, #tpu.memory_space<vmem>>, vector<1x16x256xf32>
    %34 = vector.shape_cast %33 : vector<1x16x256xf32> to vector<16x256xf32>
    %35 = vector.shape_cast %32 : vector<16x256xf32> to vector<1x16x256xf32>
    tpu.vector_store %arg8[%c0_16, %c0_17, %c0_18], %35 {strides = array<i32>} : memref<1x16x256xf32, #tpu.memory_space<vmem>>, vector<1x16x256xf32>,
    return
  }
  func.func @transform_0(%arg0: i32, %arg1: i32) -> (i32, i32, i32) {
    %c0_i32 = arith.constant 0 : i32
    %c0_i32_0 = arith.constant 0 : i32
    %c0_i32_1 = arith.constant 0 : i32
    return %arg0, %c0_i32, %c0_i32_0 : i32, i32, i32
  }
  func.func @transform_1(%arg0: i32, %arg1: i32) -> (i32, i32) {
    %c0_i32 = arith.constant 0 : i32
    %c0_i32_0 = arith.constant 0 : i32
    %c0_i32_1 = arith.constant 0 : i32
    return %c0_i32, %c0_i32_0 : i32, i32
  }
  func.func @transform_2(%arg0: i32, %arg1: i32) -> (i32, i32) {
    %c0_i32 = arith.constant 0 : i32
    %c0_i32_0 = arith.constant 0 : i32
    %c0_i32_1 = arith.constant 0 : i32
    return %c0_i32, %c0_i32_0 : i32, i32
  }
  func.func @transform_3(%arg0: i32, %arg1: i32) -> (i32, i32) {
    %c0_i32 = arith.constant 0 : i32
    %c0_i32_0 = arith.constant 0 : i32
    %c0_i32_1 = arith.constant 0 : i32
    return %c0_i32, %c0_i32_0 : i32, i32
  }
  func.func @transform_4(%arg0: i32, %arg1: i32) -> (i32, i32) {
    %c0_i32 = arith.constant 0 : i32
    %c0_i32_0 = arith.constant 0 : i32
    %c0_i32_1 = arith.constant 0 : i32
    return %c0_i32, %c0_i32_0 : i32, i32
  }
  func.func @transform_5(%arg0: i32, %arg1: i32) -> i32 {
    %c0_i32 = arith.constant 0 : i32
    %c0_i32_0 = arith.constant 0 : i32
    return %c0_i32 : i32
  }
  func.func @transform_6(%arg0: i32, %arg1: i32) -> (i32, i32, i32) {
    %c0_i32 = arith.constant 0 : i32
    %c0_i32_0 = arith.constant 0 : i32
    return %arg0, %c0_i32, %arg1 : i32, i32, i32
  }
}

</mosaic_0001>

<llo_original>
// kernel: tpu_custom_call.1
$region0: #{tpu_custom_call.1}
  #allocation0 [shape = 'u32[]', space=smem, size = 0x4, offset = 0x4, fixed_abs, tag = 'smem constant byte address 0x4 - core index']
  #allocation1 [shape = 'u32[72,128]{1,0:T(1,128)}', space=vmem, size = 0x9000, scoped, tag = 'internal scratch']
  #allocation2 [shape = 'f32[16,256]{1,0:T(8,128)}', space=vmem, size = 0x4000, scoped, tag = 'scratch operand']
  #allocation3 [shape = 'f32[1]{0:T(128)S(6)}', space=smem, size = 0x200, scoped, tag = 'scoped memory for tpu_custom_call.1']
  %s0 = inlined_call_operand.hbm [shape: f32[2,16,256], index: 0, kind: input, shape index: {}]
  %s1 = inlined_call_operand.vmem [shape: f32[16,16], index: 1, kind: input, shape index: {}]
  %s2 = inlined_call_operand.vmem [shape: f32[16,1], index: 2, kind: input, shape index: {}]
  %s3 = inlined_call_operand.vmem [shape: f32[16,16], index: 3, kind: input, shape index: {}]
  %s4 = inlined_call_operand.vmem [shape: f32[16,1], index: 4, kind: input, shape index: {}]
  %s5 = inlined_call_operand.<no memory space> [shape: f32[1], index: 5, kind: input, shape index: {}]
  %s6 = inlined_call_operand.hbm [shape: f32[2,16,256], index: 6, kind: output, shape index: {}]
  %s7 = sld [smem:[#allocation0]]
  $region65: #{tpu_custom_call.1} parent=0
    _
  %s9 = ssub.s32 1, %s7
  %s10 = scalar_select 0, %s9, %s7
  %11 = sst [smem:[#allocation3]] %s5
  $region1: #{tpu_custom_call.1} parent=0
    #allocation4 [shape = 'u8[16384]{0}', space=vmem, size = 0x4000, scoped, tag = 'input window, operand 0, single buffered']
    #allocation5 [shape = 's32[2]{0}', space=sflag, size = 0x8, scoped, tag = 'scoped memory for tpu_custom_call.1']
    #allocation6 [shape = 's32[2]{0}', space=sflag, size = 0x8, scoped, tag = 'scoped memory for tpu_custom_call.1']
    #allocation7 [shape = 'u8[32768]{0}', space=vmem, size = 0x8000, scoped, tag = 'output window, operand 0']
    %12 = vsyncpa [#allocation5], 0
    %13 = vsyncpa [#allocation6], 0
    %s14 = scalar_lea.sflag [#allocation6], 1
    %15 = vsyncpa %s14, 0
    loop: start=0, step=1, limit=4
    $region2: #{tpu_custom_call.1} parent=1 // loop_pre_header
      _
    $region3: #{tpu_custom_call.1} parent=1 // loop_header
      %s17 = sphi 0, %s21
      %p18 = scmp.ge.s32.totalorder %s17, 4
      %s24 = sphi 0, %s36
      %s25 = sphi 0, %s32
      %s26 = sphi 0, %s24
      %s27 = sphi 0, %s25
      %s28 = sphi 0, %s26
      %s29 = sphi 0, %s27
      %s39 = sphi 0, %s41
      %s42 = sphi 0, %s39
      %s43 = sphi 0, %s42
      %s59 = sphi 0, %s43
      %s63 = sphi 0, %s63
      %s65 = sphi 0, %s63
      %s66 = sphi 0, %s65
      %s80 = sphi 0, %s66
      %s84 = sphi 0, %s84
      %s86 = sphi 0, %s84
      %s87 = sphi 0, %s86
      %s101 = sphi 0, %s87
      %s105 = sphi 0, %s105
      %s107 = sphi 0, %s105
      %s108 = sphi 0, %s107
      %s122 = sphi 0, %s108
      %s126 = sphi 0, %s126
      %s128 = sphi 0, %s126
      %s129 = sphi 0, %s128
      %s143 = sphi 0, %s129
      %s147 = sphi 0, %s147
      %s149 = sphi 0, %s147
      %s150 = sphi 0, %s149
      %s164 = sphi 0, %s150
      %s172 = sphi 0, %s174
      %s175 = sphi 0, %s172
      %s176 = sphi 0, %s175
      %s192 = sphi 0, %s176
    $region4: #{tpu_custom_call.1} parent=1 // loop_header_branch
      %20 = sbr.rel (%p18) target = $region8
    $region5: #{tpu_custom_call.1} parent=1 // loop_body
      %s22 = ssub.s32 %s17, 1
      %s23 = ssub.s32 %s17, 2
      %s30 = sadd.s32 1, %s25
      %p31 = scmp.ge.s32.totalorder %s30, 1
      %s32 = scalar_select %p31, 0, %s30
      %s33 = sadd.s32 1, %s24
      %s34 = scalar_select %p31, %s33, %s24
      %p35 = scmp.ge.s32.totalorder %s34, 2
      %s36 = scalar_select %p35, 0, %s34
      %s37 = ssub.s32 %s24, %s36
      %p38 = scmp.eq.s32.totalorder %s37, 0
      %s40 = sadd.s32 %s39, 1
      %s41 = scalar_select %p38, %s39, %s40
      %p44 = pneg %p38
      %p45 = scmp.eq.s32.totalorder %s17, 1
      %p46 = por %p44, %p45
      %p47 = scmp.ne.s32.totalorder %s39, %s42
      %p48 = scmp.eq.s32.totalorder %s17, 0
      %p49 = por %p47, %p48
      %p50 = scmp.ne.s32.totalorder %s39, %s42
      %p51 = scmp.eq.s32.totalorder %s22, 1
      %p52 = por %p50, %p51
      %p53 = scmp.ne.s32.totalorder %s42, %s43
      %p54 = scmp.eq.s32.totalorder %s22, 0
      %p55 = por %p53, %p54
      %p56 = scmp.ne.s32.totalorder %s42, %s43
      %p57 = scmp.eq.s32.totalorder %s23, 1
      %p58 = por %p56, %p57
      %p60 = scmp.ne.s32.totalorder %s43, %s59
      %p61 = scmp.eq.s32.totalorder %s23, 0
      %p62 = por %p60, %p61
      %s64 = sadd.s32 %s63, 1
      %p67 = scmp.eq.s32.totalorder %s17, 1
      %p68 = scmp.ne.s32.totalorder %s63, %s65
      %p69 = scmp.eq.s32.totalorder %s17, 0
      %p70 = por %p68, %p69
      %p71 = scmp.ne.s32.totalorder %s63, %s65
      %p72 = scmp.eq.s32.totalorder %s22, 1
      %p73 = por %p71, %p72
      %p74 = scmp.ne.s32.totalorder %s65, %s66
      %p75 = scmp.eq.s32.totalorder %s22, 0
      %p76 = por %p74, %p75
      %p77 = scmp.ne.s32.totalorder %s65, %s66
      %p78 = scmp.eq.s32.totalorder %s23, 1
      %p79 = por %p77, %p78
      %p81 = scmp.ne.s32.totalorder %s66, %s80
      %p82 = scmp.eq.s32.totalorder %s23, 0
      %p83 = por %p81, %p82
      %s85 = sadd.s32 %s84, 1
      %p88 = scmp.eq.s32.totalorder %s17, 1
      %p89 = scmp.ne.s32.totalorder %s84, %s86
      %p90 = scmp.eq.s32.totalorder %s17, 0
      %p91 = por %p89, %p90
      %p92 = scmp.ne.s32.totalorder %s84, %s86
      %p93 = scmp.eq.s32.totalorder %s22, 1
      %p94 = por %p92, %p93
      %p95 = scmp.ne.s32.totalorder %s86, %s87
      %p96 = scmp.eq.s32.totalorder %s22, 0
      %p97 = por %p95, %p96
      %p98 = scmp.ne.s32.totalorder %s86, %s87
      %p99 = scmp.eq.s32.totalorder %s23, 1
      %p100 = por %p98, %p99
      %p102 = scmp.ne.s32.totalorder %s87, %s101
      %p103 = scmp.eq.s32.totalorder %s23, 0
      %p104 = por %p102, %p103
      %s106 = sadd.s32 %s105, 1
      %p109 = scmp.eq.s32.totalorder %s17, 1
      %p110 = scmp.ne.s32.totalorder %s105, %s107
      %p111 = scmp.eq.s32.totalorder %s17, 0
      %p112 = por %p110, %p111
      %p113 = scmp.ne.s32.totalorder %s105, %s107
      %p114 = scmp.eq.s32.totalorder %s22, 1
      %p115 = por %p113, %p114
      %p116 = scmp.ne.s32.totalorder %s107, %s108
      %p117 = scmp.eq.s32.totalorder %s22, 0
      %p118 = por %p116, %p117
      %p119 = scmp.ne.s32.totalorder %s107, %s108
      %p120 = scmp.eq.s32.totalorder %s23, 1
      %p121 = por %p119, %p120
      %p123 = scmp.ne.s32.totalorder %s108, %s122
      %p124 = scmp.eq.s32.totalorder %s23, 0
      %p125 = por %p123, %p124
      %s127 = sadd.s32 %s126, 1
      %p130 = scmp.eq.s32.totalorder %s17, 1
      %p131 = scmp.ne.s32.totalorder %s126, %s128
      %p132 = scmp.eq.s32.totalorder %s17, 0
      %p133 = por %p131, %p132
      %p134 = scmp.ne.s32.totalorder %s126, %s128
      %p135 = scmp.eq.s32.totalorder %s22, 1
      %p136 = por %p134, %p135
      %p137 = scmp.ne.s32.totalorder %s128, %s129
      %p138 = scmp.eq.s32.totalorder %s22, 0
      %p139 = por %p137, %p138
      %p140 = scmp.ne.s32.totalorder %s128, %s129
      %p141 = scmp.eq.s32.totalorder %s23, 1
      %p142 = por %p140, %p141
      %p144 = scmp.ne.s32.totalorder %s129, %s143
      %p145 = scmp.eq.s32.totalorder %s23, 0
      %p146 = por %p144, %p145
      %s148 = sadd.s32 %s147, 1
      %p151 = scmp.eq.s32.totalorder %s17, 1
      %p152 = scmp.ne.s32.totalorder %s147, %s149
      %p153 = scmp.eq.s32.totalorder %s17, 0
      %p154 = por %p152, %p153
      %p155 = scmp.ne.s32.totalorder %s147, %s149
      %p156 = scmp.eq.s32.totalorder %s22, 1
      %p157 = por %p155, %p156
      %p158 = scmp.ne.s32.totalorder %s149, %s150
      %p159 = scmp.eq.s32.totalorder %s22, 0
      %p160 = por %p158, %p159
      %p161 = scmp.ne.s32.totalorder %s149, %s150
      %p162 = scmp.eq.s32.totalorder %s23, 1
      %p163 = por %p161, %p162
      %p165 = scmp.ne.s32.totalorder %s150, %s164
      %p166 = scmp.eq.s32.totalorder %s23, 0
      %p167 = por %p165, %p166
      %s168 = ssub.s32 %s24, %s36
      %s169 = ssub.s32 %s25, %s32
      %s170 = sor.u32 %s168, %s169
      %p171 = scmp.eq.s32.totalorder %s170, 0
      %s173 = sadd.s32 %s172, 1
      %s174 = scalar_select %p171, %s172, %s173
      %p177 = pneg %p171
      %p178 = scmp.eq.s32.totalorder %s17, 1
      %p179 = por %p177, %p178
      %p180 = scmp.ne.s32.totalorder %s172, %s175
      %p181 = scmp.eq.s32.totalorder %s17, 0
      %p182 = por %p180, %p181
      %p183 = scmp.ne.s32.totalorder %s172, %s175
      %p184 = scmp.eq.s32.totalorder %s22, 1
      %p185 = por %p183, %p184
      %p186 = scmp.ne.s32.totalorder %s175, %s176
      %p187 = scmp.eq.s32.totalorder %s22, 0
      %p188 = por %p186, %p187
      %p189 = scmp.ne.s32.totalorder %s175, %s176
      %p190 = scmp.eq.s32.totalorder %s23, 1
      %p191 = por %p189, %p190
      %p193 = scmp.ne.s32.totalorder %s176, %s192
      %p194 = scmp.eq.s32.totalorder %s23, 0
      %p195 = por %p193, %p194
      %p196 = scmp.le.s32.totalorder 1, %s17
      %p197 = scmp.lt.s32.totalorder %s17, 3
      %p198 = pnand %p196, %p197
      %p199 = pneg %p198
      // Predicated region
      $region9: #{tpu_custom_call.1} parent=5 // pred_check
        _
      $region10: #{tpu_custom_call.1} parent=5 // pred_check_branch
        %201 = sbr.rel (%p198) target = $region12
      $region11: #{tpu_custom_call.1} parent=5 // pred_region
        %s202 = ssub.s32 %s17, 1
        // Predicated region
        $region13: #{tpu_custom_call.1} parent=11 // pred_check
          %p203 = pneg %p55
        $region14: #{tpu_custom_call.1} parent=11 // pred_check_branch
          %205 = sbr.rel (%p203) target = $region16
        $region15: #{tpu_custom_call.1} parent=11 // pred_region
          %207 = vsyncadd [#allocation5], 0
          %s208 = smul.addr %s26, 4
          %s209 = smul.addr %s208, 8
          %s210 = scalar_lea.hbm %s0, %s209
          %s211 = sshll.u32 %s210, 4
          %s212 = int_to_ptr.hbm [resolvable:$true] %s211
          %s213 = sshll.u32 [#allocation4], 4
          %s214 = int_to_ptr.vmem [resolvable:$true] %s213
          %219 = dma.hbm_to_vmem [thread:$0]  %s212, 512, %s214, [#allocation5], 256, 256, 16
        $region16: #{tpu_custom_call.1} parent=11 // pred_fallthru
          _
        // Predicated region
        $region17: #{tpu_custom_call.1} parent=11 // pred_check
          %p220 = pneg %p76
        $region18: #{tpu_custom_call.1} parent=11 // pred_check_branch
          %222 = sbr.rel (%p220) target = $region20
        $region19: #{tpu_custom_call.1} parent=11 // pred_region
          _
        $region20: #{tpu_custom_call.1} parent=11 // pred_fallthru
          _
        // Predicated region
        $region21: #{tpu_custom_call.1} parent=11 // pred_check
          %p223 = pneg %p97
        $region22: #{tpu_custom_call.1} parent=11 // pred_check_branch
          %225 = sbr.rel (%p223) target = $region24
        $region23: #{tpu_custom_call.1} parent=11 // pred_region
          _
        $region24: #{tpu_custom_call.1} parent=11 // pred_fallthru
          _
        // Predicated region
        $region25: #{tpu_custom_call.1} parent=11 // pred_check
          %p226 = pneg %p118
        $region26: #{tpu_custom_call.1} parent=11 // pred_check_branch
          %228 = sbr.rel (%p226) target = $region28
        $region27: #{tpu_custom_call.1} parent=11 // pred_region
          _
        $region28: #{tpu_custom_call.1} parent=11 // pred_fallthru
          _
        // Predicated region
        $region29: #{tpu_custom_call.1} parent=11 // pred_check
          %p229 = pneg %p139
        $region30: #{tpu_custom_call.1} parent=11 // pred_check_branch
          %231 = sbr.rel (%p229) target = $region32
        $region31: #{tpu_custom_call.1} parent=11 // pred_region
          _
        $region32: #{tpu_custom_call.1} parent=11 // pred_fallthru
          _
        // Predicated region
        $region33: #{tpu_custom_call.1} parent=11 // pred_check
          %p232 = pneg %p160
        $region34: #{tpu_custom_call.1} parent=11 // pred_check_branch
          %234 = sbr.rel (%p232) target = $region36
        $region35: #{tpu_custom_call.1} parent=11 // pred_region
          _
        $region36: #{tpu_custom_call.1} parent=11 // pred_fallthru
          _
      $region12: #{tpu_custom_call.1} parent=5 // pred_fallthru
        _
      %p235 = scmp.lt.s32.totalorder %s17, 2
      // Predicated region
      $region37: #{tpu_custom_call.1} parent=5 // pred_check
        %p236 = pneg %p235
      $region38: #{tpu_custom_call.1} parent=5 // pred_check_branch
        %238 = sbr.rel (%p236) target = $region40
      $region39: #{tpu_custom_call.1} parent=5 // pred_region
        _
      $region40: #{tpu_custom_call.1} parent=5 // pred_fallthru
        _
      %p239 = scmp.le.s32.totalorder 1, %s17
      %p240 = scmp.lt.s32.totalorder %s17, 3
      %p241 = pnand %p239, %p240
      %p242 = pneg %p241
      // Predicated region
      $region41: #{tpu_custom_call.1} parent=5 // pred_check
        _
      $region42: #{tpu_custom_call.1} parent=5 // pred_check_branch
        %244 = sbr.rel (%p241) target = $region44
      $region43: #{tpu_custom_call.1} parent=5 // pred_region
        %s245 = ssub.s32 %s17, 1
        // Predicated region
        $region45: #{tpu_custom_call.1} parent=43 // pred_check
          %p246 = pneg %p55
        $region46: #{tpu_custom_call.1} parent=43 // pred_check_branch
          %248 = sbr.rel (%p246) target = $region48
        $region47: #{tpu_custom_call.1} parent=43 // pred_region
          %250 = dma.done [#allocation5], 512
        $region48: #{tpu_custom_call.1} parent=43 // pred_fallthru
          _
        %p251 = pneg %p55
        %p252 = pneg %p52
        %p253 = pneg %p76
        %p254 = pneg %p73
        %p255 = pneg %p97
        %p256 = pneg %p94
        %p257 = pneg %p118
        %p258 = pneg %p115
        %p259 = pneg %p139
        %p260 = pneg %p136
        %p261 = pneg %p160
        %p262 = pneg %p157
        %p263 = pneg %p188
        %p264 = pneg %p185
        %s265 = sand.u32 %s175, 1
        %s266 = scalar_lea.sflag [#allocation6], %s265
        %s267 = sand.u32 %s175, 1
        %s268 = smul.addr %s267, 32
        %s269 = scalar_lea.vmem [#allocation7], %s268
        %s270 = smul.u32 2, %s27
        %p271 = scmp.eq.s32.totalorder %s27, 0
        // Predicated region
        $region49: #{tpu_custom_call.1} parent=43 // pred_check
          %p272 = pneg %p271
        $region50: #{tpu_custom_call.1} parent=43 // pred_check_branch
          %274 = sbr.rel (%p272) target = $region52
        $region51: #{tpu_custom_call.1} parent=43 // pred_region
          %v275 = vld [vmem:[%s3] sm:$0xff]
          %v276 = vld [vmem:[%s3 + $0x8] sm:$0xff]
          %v277 = vld [vmem:[#allocation4] sm:$0xff]
          %v278 = vld [vmem:[#allocation4 + $0x8] sm:$0xff]
          %v279 = vld [vmem:[#allocation4 + $0x10] sm:$0xff]
          %v280 = vld [vmem:[#allocation4 + $0x18] sm:$0xff]
          %v281 = vld [vmem:[%s4] sm:$0xff]
          %v282 = vld [vmem:[%s4 + $0x8] sm:$0xff]
          %284 = vset.pattern.permute.xlu0 0
          %285 = vperm.xlu0 %284, %v281
          %v286 = vpop.permute.xlu0 %285
          %289 = vset.pattern.permute.xlu0 0
          %290 = vperm.xlu0 %289, %v282
          %v291 = vpop.permute.xlu0 %290
          %vm293 = vcmask 130048
          %v295 = vsel %vm293, %v275, 0
          %v298 = vsel %vm293, %v276, 0
          %300 = vmatpush.msra.mxu0 0.0
          %301 = vmatpush.msra.mxu0 0.0
          %302 = vmatpush.msra.mxu0 0.0
          %303 = vmatpush.msra.mxu0 0.0
          %304 = vmatpush.msra.mxu0 0.0
          %305 = vmatpush.msra.mxu0 0.0
          %306 = vmatpush.msra.mxu0 0.0
          %307 = vmatpush.msra.mxu0 0.0
          %308 = vmatpush.msra.mxu0 0.0
          %309 = vmatpush.msra.mxu0 0.0
          %310 = vmatpush.msra.mxu0 0.0
          %311 = vmatpush.msra.mxu0 0.0
          %312 = vmatpush.msra.mxu0 0.0
          %313 = vmatpush.msra.mxu0 0.0
          %314 = vmatpush.msra.mxu0 %v279
          %315 = vmatpush.msra.mxu0 %v277
          %316 = vmatmul.f32.gmra.mxu0 %v295
          %v317 = vpop.f32.mrf.mxu0
          %v318 = vadd.f32 %v286, %v317
          %319 = vmatmul.f32.gmra.mxu0 %v298
          %v320 = vpop.f32.mrf.mxu0
          %v321 = vadd.f32 %v291, %v320
          %322 = vdwg.mxu0
          %323 = vmatpush.msra.mxu0 0.0
          %324 = vmatpush.msra.mxu0 0.0
          %325 = vmatpush.msra.mxu0 0.0
          %326 = vmatpush.msra.mxu0 0.0
          %327 = vmatpush.msra.mxu0 0.0
          %328 = vmatpush.msra.mxu0 0.0
          %329 = vmatpush.msra.mxu0 0.0
          %330 = vmatpush.msra.mxu0 0.0
          %331 = vmatpush.msra.mxu0 0.0
          %332 = vmatpush.msra.mxu0 0.0
          %333 = vmatpush.msra.mxu0 0.0
          %334 = vmatpush.msra.mxu0 0.0
          %335 = vmatpush.msra.mxu0 0.0
          %336 = vmatpush.msra.mxu0 0.0
          %337 = vmatpush.msra.mxu0 %v280
          %338 = vmatpush.msra.mxu0 %v278
          %339 = vmatmul.f32.gmra.mxu0 %v295
          %v340 = vpop.f32.mrf.mxu0
          %v341 = vadd.f32 %v286, %v340
          %342 = vmatmul.f32.gmra.mxu0 %v298
          %v343 = vpop.f32.mrf.mxu0
          %v344 = vadd.f32 %v291, %v343
          %345 = vdwg.mxu0
          %346 = vst [vmem:[#allocation2] sm:$0xff] %v318
          %347 = vst [vmem:[#allocation2 + $0x8] sm:$0xff] %v341
          %348 = vst [vmem:[#allocation2 + $0x10] sm:$0xff] %v321
          %349 = vst [vmem:[#allocation2 + $0x18] sm:$0xff] %v344
        $region52: #{tpu_custom_call.1} parent=43 // pred_fallthru
          _
        %s350 = smul.u32 %s27, 256
        %s351 = sshra.s32 %s350, 7
        %s352 = sand.u32 %s350, 127
        %s353 = smul.addr %s351, 8
        %s354 = scalar_lea.vmem [#allocation4], %s353
        %v355 = vld [vmem:[%s354] sm:$0xff]
        %v356 = vld [vmem:[%s354 + $0x8] sm:$0xff]
        %v357 = vld [vmem:[%s354 + $0x10] sm:$0xff]
        %v358 = vld [vmem:[%s354 + $0x18] sm:$0xff]
        %v359 = vld [vmem:[%s1] sm:$0xff]
        %v360 = vld [vmem:[%s1 + $0x8] sm:$0xff]
        %v361 = vld [vmem:[%s2] sm:$0xff]
        %v362 = vld [vmem:[%s2 + $0x8] sm:$0xff]
        %364 = vset.pattern.permute.xlu0 0
        %365 = vperm.xlu0 %364, %v361
        %v366 = vpop.permute.xlu0 %365
        %369 = vset.pattern.permute.xlu0 0
        %370 = vperm.xlu0 %369, %v362
        %v371 = vpop.permute.xlu0 %370
        %vm373 = vcmask 130048
        %v375 = vsel %vm373, %v359, 0
        %v378 = vsel %vm373, %v360, 0
        %380 = vmatpush.msra.mxu0 0.0
        %381 = vmatpush.msra.mxu0 0.0
        %382 = vmatpush.msra.mxu0 0.0
        %383 = vmatpush.msra.mxu0 0.0
        %384 = vmatpush.msra.mxu0 0.0
        %385 = vmatpush.msra.mxu0 0.0
        %386 = vmatpush.msra.mxu0 0.0
        %387 = vmatpush.msra.mxu0 0.0
        %388 = vmatpush.msra.mxu0 0.0
        %389 = vmatpush.msra.mxu0 0.0
        %390 = vmatpush.msra.mxu0 0.0
        %391 = vmatpush.msra.mxu0 0.0
        %392 = vmatpush.msra.mxu0 0.0
        %393 = vmatpush.msra.mxu0 0.0
        %394 = vmatpush.msra.mxu0 %v357
        %395 = vmatpush.msra.mxu0 %v355
        %396 = vmatmul.f32.gmra.mxu0 %v375
        %v397 = vpop.f32.mrf.mxu0
        %v398 = vadd.f32 %v366, %v397
        %399 = vmatmul.f32.gmra.mxu0 %v378
        %v400 = vpop.f32.mrf.mxu0
        %v401 = vadd.f32 %v371, %v400
        %402 = vdwg.mxu0
        %403 = vmatpush.msra.mxu0 0.0
        %404 = vmatpush.msra.mxu0 0.0
        %405 = vmatpush.msra.mxu0 0.0
        %406 = vmatpush.msra.mxu0 0.0
        %407 = vmatpush.msra.mxu0 0.0
        %408 = vmatpush.msra.mxu0 0.0
        %409 = vmatpush.msra.mxu0 0.0
        %410 = vmatpush.msra.mxu0 0.0
        %411 = vmatpush.msra.mxu0 0.0
        %412 = vmatpush.msra.mxu0 0.0
        %413 = vmatpush.msra.mxu0 0.0
        %414 = vmatpush.msra.mxu0 0.0
        %415 = vmatpush.msra.mxu0 0.0
        %416 = vmatpush.msra.mxu0 0.0
        %417 = vmatpush.msra.mxu0 %v358
        %418 = vmatpush.msra.mxu0 %v356
        %419 = vmatmul.f32.gmra.mxu0 %v375
        %v420 = vpop.f32.mrf.mxu0
        %v421 = vadd.f32 %v366, %v420
        %422 = vmatmul.f32.gmra.mxu0 %v378
        %v423 = vpop.f32.mrf.mxu0
        %v424 = vadd.f32 %v371, %v423
        %425 = vdwg.mxu0
        %426 = vxpose.xlu0.b32.start [1/16] %v398, 128
        %427 = vxpose.xlu0.b32.cont [2/16] %v401, 128
        %428 = vxpose.xlu0.b32.cont [3/16] 0.0, 128
        %429 = vxpose.xlu0.b32.cont [4/16] 0.0, 128
        %430 = vxpose.xlu0.b32.cont [5/16] 0.0, 128
        %431 = vxpose.xlu0.b32.cont [6/16] 0.0, 128
        %432 = vxpose.xlu0.b32.cont [7/16] 0.0, 128
        %433 = vxpose.xlu0.b32.cont [8/16] 0.0, 128
        %434 = vxpose.xlu0.b32.cont [9/16] 0.0, 128
        %435 = vxpose.xlu0.b32.cont [10/16] 0.0, 128
        %436 = vxpose.xlu0.b32.cont [11/16] 0.0, 128
        %437 = vxpose.xlu0.b32.cont [12/16] 0.0, 128
        %438 = vxpose.xlu0.b32.cont [13/16] 0.0, 128
        %439 = vxpose.xlu0.b32.cont [14/16] 0.0, 128
        %440 = vxpose.xlu0.b32.cont [15/16] 0.0, 128
        %441 = vxpose.xlu0.b32.end [16/16] 0.0, 128
        %v442 = vpop.trf.xlu0
        %v443 = vpop.trf.xlu0
        %v444 = vpop.trf.xlu0
        %v445 = vpop.trf.xlu0
        %v446 = vpop.trf.xlu0
        %v447 = vpop.trf.xlu0
        %v448 = vpop.trf.xlu0
        %v449 = vpop.trf.xlu0
        %v450 = vpop.trf.xlu0
        %v451 = vpop.trf.xlu0
        %v452 = vpop.trf.xlu0
        %v453 = vpop.trf.xlu0
        %v454 = vpop.trf.xlu0
        %v455 = vpop.trf.xlu0
        %v456 = vpop.trf.xlu0
        %v457 = vpop.trf.xlu0
        %458 = vxpose.xlu0.b32.start [1/16] %v421, 128
        %459 = vxpose.xlu0.b32.cont [2/16] %v424, 128
        %460 = vxpose.xlu0.b32.cont [3/16] 0.0, 128
        %461 = vxpose.xlu0.b32.cont [4/16] 0.0, 128
        %462 = vxpose.xlu0.b32.cont [5/16] 0.0, 128
        %463 = vxpose.xlu0.b32.cont [6/16] 0.0, 128
        %464 = vxpose.xlu0.b32.cont [7/16] 0.0, 128
        %465 = vxpose.xlu0.b32.cont [8/16] 0.0, 128
        %466 = vxpose.xlu0.b32.cont [9/16] 0.0, 128
        %467 = vxpose.xlu0.b32.cont [10/16] 0.0, 128
        %468 = vxpose.xlu0.b32.cont [11/16] 0.0, 128
        %469 = vxpose.xlu0.b32.cont [12/16] 0.0, 128
        %470 = vxpose.xlu0.b32.cont [13/16] 0.0, 128
        %471 = vxpose.xlu0.b32.cont [14/16] 0.0, 128
        %472 = vxpose.xlu0.b32.cont [15/16] 0.0, 128
        %473 = vxpose.xlu0.b32.end [16/16] 0.0, 128
        %v474 = vpop.trf.xlu0
        %v475 = vpop.trf.xlu0
        %v476 = vpop.trf.xlu0
        %v477 = vpop.trf.xlu0
        %v478 = vpop.trf.xlu0
        %v479 = vpop.trf.xlu0
        %v480 = vpop.trf.xlu0
        %v481 = vpop.trf.xlu0
        %v482 = vpop.trf.xlu0
        %v483 = vpop.trf.xlu0
        %v484 = vpop.trf.xlu0
        %v485 = vpop.trf.xlu0
        %v486 = vpop.trf.xlu0
        %v487 = vpop.trf.xlu0
        %v488 = vpop.trf.xlu0
        %v489 = vpop.trf.xlu0
        %v490 = vld [vmem:[#allocation4] sm:$0xff]
        %v491 = vld [vmem:[#allocation4 + $0x8] sm:$0xff]
        %v492 = vld [vmem:[#allocation4 + $0x10] sm:$0xff]
        %v493 = vld [vmem:[#allocation4 + $0x18] sm:$0xff]
        %v495 = vsel %vm373, %v442, 0
        %v498 = vsel %vm373, %v443, 0
        %v501 = vsel %vm373, %v444, 0
        %v504 = vsel %vm373, %v445, 0
        %v507 = vsel %vm373, %v446, 0
        %v510 = vsel %vm373, %v447, 0
        %v513 = vsel %vm373, %v448, 0
        %v516 = vsel %vm373, %v449, 0
        %v519 = vsel %vm373, %v450, 0
        %v522 = vsel %vm373, %v451, 0
        %v525 = vsel %vm373, %v452, 0
        %v528 = vsel %vm373, %v453, 0
        %v531 = vsel %vm373, %v454, 0
        %v534 = vsel %vm373, %v455, 0
        %v537 = vsel %vm373, %v456, 0
        %v540 = vsel %vm373, %v457, 0
        %v543 = vsel %vm373, %v474, 0
        %v546 = vsel %vm373, %v475, 0
        %v549 = vsel %vm373, %v476, 0
        %v552 = vsel %vm373, %v477, 0
        %v555 = vsel %vm373, %v478, 0
        %v558 = vsel %vm373, %v479, 0
        %v561 = vsel %vm373, %v480, 0
        %v564 = vsel %vm373, %v481, 0
        %v567 = vsel %vm373, %v482, 0
        %v570 = vsel %vm373, %v483, 0
        %v573 = vsel %vm373, %v484, 0
        %v576 = vsel %vm373, %v485, 0
        %v579 = vsel %vm373, %v486, 0
        %v582 = vsel %vm373, %v487, 0
        %v585 = vsel %vm373, %v488, 0
        %v588 = vsel %vm373, %v489, 0
        %590 = vmatpush.msra.mxu0 0.0
        %591 = vmatpush.msra.mxu0 0.0
        %592 = vmatpush.msra.mxu0 0.0
        %593 = vmatpush.msra.mxu0 0.0
        %594 = vmatpush.msra.mxu0 0.0
        %595 = vmatpush.msra.mxu0 0.0
        %596 = vmatpush.msra.mxu0 0.0
        %597 = vmatpush.msra.mxu0 0.0
        %598 = vmatpush.msra.mxu0 0.0
        %599 = vmatpush.msra.mxu0 0.0
        %600 = vmatpush.msra.mxu0 0.0
        %601 = vmatpush.msra.mxu0 0.0
        %602 = vmatpush.msra.mxu0 0.0
        %603 = vmatpush.msra.mxu0 0.0
        %604 = vmatpush.msra.mxu0 %v492
        %605 = vmatpush.msra.mxu0 %v490
        %606 = vmatmul.f32.gmra.mxu0 %v495
        %v607 = vpop.f32.mrf.mxu0
        %v608 = vadd.f32 0.0, %v607
        %609 = vmatmul.f32.gmra.mxu0 %v498
        %v610 = vpop.f32.mrf.mxu0
        %v611 = vadd.f32 0.0, %v610
        %612 = vmatmul.f32.gmra.mxu0 %v501
        %v613 = vpop.f32.mrf.mxu0
        %v614 = vadd.f32 0.0, %v613
        %615 = vmatmul.f32.gmra.mxu0 %v504
        %v616 = vpop.f32.mrf.mxu0
        %v617 = vadd.f32 0.0, %v616
        %618 = vmatmul.f32.gmra.mxu0 %v507
        %v619 = vpop.f32.mrf.mxu0
        %v620 = vadd.f32 0.0, %v619
        %621 = vmatmul.f32.gmra.mxu0 %v510
        %v622 = vpop.f32.mrf.mxu0
        %v623 = vadd.f32 0.0, %v622
        %624 = vmatmul.f32.gmra.mxu0 %v513
        %v625 = vpop.f32.mrf.mxu0
        %v626 = vadd.f32 0.0, %v625
        %627 = vmatmul.f32.gmra.mxu0 %v516
        %v628 = vpop.f32.mrf.mxu0
        %v629 = vadd.f32 0.0, %v628
        %630 = vmatmul.f32.gmra.mxu0 %v519
        %v631 = vpop.f32.mrf.mxu0
        %v632 = vadd.f32 0.0, %v631
        %633 = vmatmul.f32.gmra.mxu0 %v522
        %v634 = vpop.f32.mrf.mxu0
        %v635 = vadd.f32 0.0, %v634
        %636 = vmatmul.f32.gmra.mxu0 %v525
        %v637 = vpop.f32.mrf.mxu0
        %v638 = vadd.f32 0.0, %v637
        %639 = vmatmul.f32.gmra.mxu0 %v528
        %v640 = vpop.f32.mrf.mxu0
        %v641 = vadd.f32 0.0, %v640
        %642 = vmatmul.f32.gmra.mxu0 %v531
        %v643 = vpop.f32.mrf.mxu0
        %v644 = vadd.f32 0.0, %v643
        %645 = vmatmul.f32.gmra.mxu0 %v534
        %v646 = vpop.f32.mrf.mxu0
        %v647 = vadd.f32 0.0, %v646
        %648 = vmatmul.f32.gmra.mxu0 %v537
        %v649 = vpop.f32.mrf.mxu0
        %v650 = vadd.f32 0.0, %v649
        %651 = vmatmul.f32.gmra.mxu0 %v540
        %v652 = vpop.f32.mrf.mxu0
        %v653 = vadd.f32 0.0, %v652
        %654 = vmatmul.f32.gmra.mxu0 %v543
        %v655 = vpop.f32.mrf.mxu0
        %v656 = vadd.f32 0.0, %v655
        %657 = vmatmul.f32.gmra.mxu0 %v546
        %v658 = vpop.f32.mrf.mxu0
        %v659 = vadd.f32 0.0, %v658
        %660 = vmatmul.f32.gmra.mxu0 %v549
        %v661 = vpop.f32.mrf.mxu0
        %v662 = vadd.f32 0.0, %v661
        %663 = vmatmul.f32.gmra.mxu0 %v552
        %v664 = vpop.f32.mrf.mxu0
        %v665 = vadd.f32 0.0, %v664
        %666 = vmatmul.f32.gmra.mxu0 %v555
        %v667 = vpop.f32.mrf.mxu0
        %v668 = vadd.f32 0.0, %v667
        %669 = vmatmul.f32.gmra.mxu0 %v558
        %v670 = vpop.f32.mrf.mxu0
        %v671 = vadd.f32 0.0, %v670
        %672 = vmatmul.f32.gmra.mxu0 %v561
        %v673 = vpop.f32.mrf.mxu0
        %v674 = vadd.f32 0.0, %v673
        %675 = vmatmul.f32.gmra.mxu0 %v564
        %v676 = vpop.f32.mrf.mxu0
        %v677 = vadd.f32 0.0, %v676
        %678 = vmatmul.f32.gmra.mxu0 %v567
        %v679 = vpop.f32.mrf.mxu0
        %v680 = vadd.f32 0.0, %v679
        %681 = vmatmul.f32.gmra.mxu0 %v570
        %v682 = vpop.f32.mrf.mxu0
        %v683 = vadd.f32 0.0, %v682
        %684 = vmatmul.f32.gmra.mxu0 %v573
        %v685 = vpop.f32.mrf.mxu0
        %v686 = vadd.f32 0.0, %v685
        %687 = vmatmul.f32.gmra.mxu0 %v576
        %v688 = vpop.f32.mrf.mxu0
        %v689 = vadd.f32 0.0, %v688
        %690 = vmatmul.f32.gmra.mxu0 %v579
        %v691 = vpop.f32.mrf.mxu0
        %v692 = vadd.f32 0.0, %v691
        %693 = vmatmul.f32.gmra.mxu0 %v582
        %v694 = vpop.f32.mrf.mxu0
        %v695 = vadd.f32 0.0, %v694
        %696 = vmatmul.f32.gmra.mxu0 %v585
        %v697 = vpop.f32.mrf.mxu0
        %v698 = vadd.f32 0.0, %v697
        %699 = vmatmul.f32.gmra.mxu0 %v588
        %v700 = vpop.f32.mrf.mxu0
        %v701 = vadd.f32 0.0, %v700
        %702 = vdwg.mxu0
        %703 = vmatpush.msra.mxu0 0.0
        %704 = vmatpush.msra.mxu0 0.0
        %705 = vmatpush.msra.mxu0 0.0
        %706 = vmatpush.msra.mxu0 0.0
        %707 = vmatpush.msra.mxu0 0.0
        %708 = vmatpush.msra.mxu0 0.0
        %709 = vmatpush.msra.mxu0 0.0
        %710 = vmatpush.msra.mxu0 0.0
        %711 = vmatpush.msra.mxu0 0.0
        %712 = vmatpush.msra.mxu0 0.0
        %713 = vmatpush.msra.mxu0 0.0
        %714 = vmatpush.msra.mxu0 0.0
        %715 = vmatpush.msra.mxu0 0.0
        %716 = vmatpush.msra.mxu0 0.0
        %717 = vmatpush.msra.mxu0 %v493
        %718 = vmatpush.msra.mxu0 %v491
        %719 = vmatmul.f32.gmra.mxu0 %v495
        %v720 = vpop.f32.mrf.mxu0
        %v721 = vadd.f32 0.0, %v720
        %722 = vmatmul.f32.gmra.mxu0 %v498
        %v723 = vpop.f32.mrf.mxu0
        %v724 = vadd.f32 0.0, %v723
        %725 = vmatmul.f32.gmra.mxu0 %v501
        %v726 = vpop.f32.mrf.mxu0
        %v727 = vadd.f32 0.0, %v726
        %728 = vmatmul.f32.gmra.mxu0 %v504
        %v729 = vpop.f32.mrf.mxu0
        %v730 = vadd.f32 0.0, %v729
        %731 = vmatmul.f32.gmra.mxu0 %v507
        %v732 = vpop.f32.mrf.mxu0
        %v733 = vadd.f32 0.0, %v732
        %734 = vmatmul.f32.gmra.mxu0 %v510
        %v735 = vpop.f32.mrf.mxu0
        %v736 = vadd.f32 0.0, %v735
        %737 = vmatmul.f32.gmra.mxu0 %v513
        %v738 = vpop.f32.mrf.mxu0
        %v739 = vadd.f32 0.0, %v738
        %740 = vmatmul.f32.gmra.mxu0 %v516
        %v741 = vpop.f32.mrf.mxu0
        %v742 = vadd.f32 0.0, %v741
        %743 = vmatmul.f32.gmra.mxu0 %v519
        %v744 = vpop.f32.mrf.mxu0
        %v745 = vadd.f32 0.0, %v744
        %746 = vmatmul.f32.gmra.mxu0 %v522
        %v747 = vpop.f32.mrf.mxu0
        %v748 = vadd.f32 0.0, %v747
        %749 = vmatmul.f32.gmra.mxu0 %v525
        %v750 = vpop.f32.mrf.mxu0
        %v751 = vadd.f32 0.0, %v750
        %752 = vmatmul.f32.gmra.mxu0 %v528
        %v753 = vpop.f32.mrf.mxu0
        %v754 = vadd.f32 0.0, %v753
        %755 = vmatmul.f32.gmra.mxu0 %v531
        %v756 = vpop.f32.mrf.mxu0
        %v757 = vadd.f32 0.0, %v756
        %758 = vmatmul.f32.gmra.mxu0 %v534
        %v759 = vpop.f32.mrf.mxu0
        %v760 = vadd.f32 0.0, %v759
        %761 = vmatmul.f32.gmra.mxu0 %v537
        %v762 = vpop.f32.mrf.mxu0
        %v763 = vadd.f32 0.0, %v762
        %764 = vmatmul.f32.gmra.mxu0 %v540
        %v765 = vpop.f32.mrf.mxu0
        %v766 = vadd.f32 0.0, %v765
        %767 = vmatmul.f32.gmra.mxu0 %v543
        %v768 = vpop.f32.mrf.mxu0
        %v769 = vadd.f32 0.0, %v768
        %770 = vmatmul.f32.gmra.mxu0 %v546
        %v771 = vpop.f32.mrf.mxu0
        %v772 = vadd.f32 0.0, %v771
        %773 = vmatmul.f32.gmra.mxu0 %v549
        %v774 = vpop.f32.mrf.mxu0
        %v775 = vadd.f32 0.0, %v774
        %776 = vmatmul.f32.gmra.mxu0 %v552
        %v777 = vpop.f32.mrf.mxu0
        %v778 = vadd.f32 0.0, %v777
        %779 = vmatmul.f32.gmra.mxu0 %v555
        %v780 = vpop.f32.mrf.mxu0
        %v781 = vadd.f32 0.0, %v780
        %782 = vmatmul.f32.gmra.mxu0 %v558
        %v783 = vpop.f32.mrf.mxu0
        %v784 = vadd.f32 0.0, %v783
        %785 = vmatmul.f32.gmra.mxu0 %v561
        %v786 = vpop.f32.mrf.mxu0
        %v787 = vadd.f32 0.0, %v786
        %788 = vmatmul.f32.gmra.mxu0 %v564
        %v789 = vpop.f32.mrf.mxu0
        %v790 = vadd.f32 0.0, %v789
        %791 = vmatmul.f32.gmra.mxu0 %v567
        %v792 = vpop.f32.mrf.mxu0
        %v793 = vadd.f32 0.0, %v792
        %794 = vmatmul.f32.gmra.mxu0 %v570
        %v795 = vpop.f32.mrf.mxu0
        %v796 = vadd.f32 0.0, %v795
        %797 = vmatmul.f32.gmra.mxu0 %v573
        %v798 = vpop.f32.mrf.mxu0
        %v799 = vadd.f32 0.0, %v798
        %800 = vmatmul.f32.gmra.mxu0 %v576
        %v801 = vpop.f32.mrf.mxu0
        %v802 = vadd.f32 0.0, %v801
        %803 = vmatmul.f32.gmra.mxu0 %v579
        %v804 = vpop.f32.mrf.mxu0
        %v805 = vadd.f32 0.0, %v804
        %806 = vmatmul.f32.gmra.mxu0 %v582
        %v807 = vpop.f32.mrf.mxu0
        %v808 = vadd.f32 0.0, %v807
        %809 = vmatmul.f32.gmra.mxu0 %v585
        %v810 = vpop.f32.mrf.mxu0
        %v811 = vadd.f32 0.0, %v810
        %812 = vmatmul.f32.gmra.mxu0 %v588
        %v813 = vpop.f32.mrf.mxu0
        %v814 = vadd.f32 0.0, %v813
        %815 = vdwg.mxu0
        %v816 = vmax.f32 %v608, %v721
        %817 = vmax.xlane.f32.xlu0 %v816
        %v818 = vpop.xlane.xlu0 %817
        %v819 = vmax.f32 %v611, %v724
        %820 = vmax.xlane.f32.xlu0 %v819
        %v821 = vpop.xlane.xlu0 %820
        %v822 = vmax.f32 %v614, %v727
        %823 = vmax.xlane.f32.xlu0 %v822
        %v824 = vpop.xlane.xlu0 %823
        %v825 = vmax.f32 %v617, %v730
        %826 = vmax.xlane.f32.xlu0 %v825
        %v827 = vpop.xlane.xlu0 %826
        %v828 = vmax.f32 %v620, %v733
        %829 = vmax.xlane.f32.xlu0 %v828
        %v830 = vpop.xlane.xlu0 %829
        %v831 = vmax.f32 %v623, %v736
        %832 = vmax.xlane.f32.xlu0 %v831
        %v833 = vpop.xlane.xlu0 %832
        %v834 = vmax.f32 %v626, %v739
        %835 = vmax.xlane.f32.xlu0 %v834
        %v836 = vpop.xlane.xlu0 %835
        %v837 = vmax.f32 %v629, %v742
        %838 = vmax.xlane.f32.xlu0 %v837
        %v839 = vpop.xlane.xlu0 %838
        %v840 = vmax.f32 %v632, %v745
        %841 = vmax.xlane.f32.xlu0 %v840
        %v842 = vpop.xlane.xlu0 %841
        %v843 = vmax.f32 %v635, %v748
        %844 = vmax.xlane.f32.xlu0 %v843
        %v845 = vpop.xlane.xlu0 %844
        %v846 = vmax.f32 %v638, %v751
        %847 = vmax.xlane.f32.xlu0 %v846
        %v848 = vpop.xlane.xlu0 %847
        %v849 = vmax.f32 %v641, %v754
        %850 = vmax.xlane.f32.xlu0 %v849
        %v851 = vpop.xlane.xlu0 %850
        %v852 = vmax.f32 %v644, %v757
        %853 = vmax.xlane.f32.xlu0 %v852
        %v854 = vpop.xlane.xlu0 %853
        %v855 = vmax.f32 %v647, %v760
        %856 = vmax.xlane.f32.xlu0 %v855
        %v857 = vpop.xlane.xlu0 %856
        %v858 = vmax.f32 %v650, %v763
        %859 = vmax.xlane.f32.xlu0 %v858
        %v860 = vpop.xlane.xlu0 %859
        %v861 = vmax.f32 %v653, %v766
        %862 = vmax.xlane.f32.xlu0 %v861
        %v863 = vpop.xlane.xlu0 %862
        %v864 = vmax.f32 %v656, %v769
        %865 = vmax.xlane.f32.xlu0 %v864
        %v866 = vpop.xlane.xlu0 %865
        %v867 = vmax.f32 %v659, %v772
        %868 = vmax.xlane.f32.xlu0 %v867
        %v869 = vpop.xlane.xlu0 %868
        %v870 = vmax.f32 %v662, %v775
        %871 = vmax.xlane.f32.xlu0 %v870
        %v872 = vpop.xlane.xlu0 %871
        %v873 = vmax.f32 %v665, %v778
        %874 = vmax.xlane.f32.xlu0 %v873
        %v875 = vpop.xlane.xlu0 %874
        %v876 = vmax.f32 %v668, %v781
        %877 = vmax.xlane.f32.xlu0 %v876
        %v878 = vpop.xlane.xlu0 %877
        %v879 = vmax.f32 %v671, %v784
        %880 = vmax.xlane.f32.xlu0 %v879
        %v881 = vpop.xlane.xlu0 %880
        %v882 = vmax.f32 %v674, %v787
        %883 = vmax.xlane.f32.xlu0 %v882
        %v884 = vpop.xlane.xlu0 %883
        %v885 = vmax.f32 %v677, %v790
        %886 = vmax.xlane.f32.xlu0 %v885
        %v887 = vpop.xlane.xlu0 %886
        %v888 = vmax.f32 %v680, %v793
        %889 = vmax.xlane.f32.xlu0 %v888
        %v890 = vpop.xlane.xlu0 %889
        %v891 = vmax.f32 %v683, %v796
        %892 = vmax.xlane.f32.xlu0 %v891
        %v893 = vpop.xlane.xlu0 %892
        %v894 = vmax.f32 %v686, %v799
        %895 = vmax.xlane.f32.xlu0 %v894
        %v896 = vpop.xlane.xlu0 %895
        %v897 = vmax.f32 %v689, %v802
        %898 = vmax.xlane.f32.xlu0 %v897
        %v899 = vpop.xlane.xlu0 %898
        %v900 = vmax.f32 %v692, %v805
        %901 = vmax.xlane.f32.xlu0 %v900
        %v902 = vpop.xlane.xlu0 %901
        %v903 = vmax.f32 %v695, %v808
        %904 = vmax.xlane.f32.xlu0 %v903
        %v905 = vpop.xlane.xlu0 %904
        %v906 = vmax.f32 %v698, %v811
        %907 = vmax.xlane.f32.xlu0 %v906
        %v908 = vpop.xlane.xlu0 %907
        %v909 = vmax.f32 %v701, %v814
        %910 = vmax.xlane.f32.xlu0 %v909
        %v911 = vpop.xlane.xlu0 %910
        %v912 = vsub.f32 %v608, %v818
        %v913 = vsub.f32 %v721, %v818
        %v914 = vsub.f32 %v611, %v821
        %v915 = vsub.f32 %v724, %v821
        %v916 = vsub.f32 %v614, %v824
        %v917 = vsub.f32 %v727, %v824
        %v918 = vsub.f32 %v617, %v827
        %v919 = vsub.f32 %v730, %v827
        %v920 = vsub.f32 %v620, %v830
        %v921 = vsub.f32 %v733, %v830
        %v922 = vsub.f32 %v623, %v833
        %v923 = vsub.f32 %v736, %v833
        %v924 = vsub.f32 %v626, %v836
        %v925 = vsub.f32 %v739, %v836
        %v926 = vsub.f32 %v629, %v839
        %v927 = vsub.f32 %v742, %v839
        %v928 = vsub.f32 %v632, %v842
        %v929 = vsub.f32 %v745, %v842
        %v930 = vsub.f32 %v635, %v845
        %v931 = vsub.f32 %v748, %v845
        %v932 = vsub.f32 %v638, %v848
        %v933 = vsub.f32 %v751, %v848
        %v934 = vsub.f32 %v641, %v851
        %v935 = vsub.f32 %v754, %v851
        %v936 = vsub.f32 %v644, %v854
        %v937 = vsub.f32 %v757, %v854
        %v938 = vsub.f32 %v647, %v857
        %v939 = vsub.f32 %v760, %v857
        %v940 = vsub.f32 %v650, %v860
        %v941 = vsub.f32 %v763, %v860
        %v942 = vsub.f32 %v653, %v863
        %v943 = vsub.f32 %v766, %v863
        %v944 = vsub.f32 %v656, %v866
        %v945 = vsub.f32 %v769, %v866
        %v946 = vsub.f32 %v659, %v869
        %v947 = vsub.f32 %v772, %v869
        %v948 = vsub.f32 %v662, %v872
        %v949 = vsub.f32 %v775, %v872
        %v950 = vsub.f32 %v665, %v875
        %v951 = vsub.f32 %v778, %v875
        %v952 = vsub.f32 %v668, %v878
        %v953 = vsub.f32 %v781, %v878
        %v954 = vsub.f32 %v671, %v881
        %v955 = vsub.f32 %v784, %v881
        %v956 = vsub.f32 %v674, %v884
        %v957 = vsub.f32 %v787, %v884
        %v958 = vsub.f32 %v677, %v887
        %v959 = vsub.f32 %v790, %v887
        %v960 = vsub.f32 %v680, %v890
        %v961 = vsub.f32 %v793, %v890
        %v962 = vsub.f32 %v683, %v893
        %v963 = vsub.f32 %v796, %v893
        %v964 = vsub.f32 %v686, %v896
        %v965 = vsub.f32 %v799, %v896
        %v966 = vsub.f32 %v689, %v899
        %v967 = vsub.f32 %v802, %v899
        %v968 = vsub.f32 %v692, %v902
        %v969 = vsub.f32 %v805, %v902
        %v970 = vsub.f32 %v695, %v905
        %v971 = vsub.f32 %v808, %v905
        %v972 = vsub.f32 %v698, %v908
        %v973 = vsub.f32 %v811, %v908
        %v974 = vsub.f32 %v701, %v911
        %v975 = vsub.f32 %v814, %v911
        %v976 = vmul.f32 %v912, 1.442695
        %v977 = vpow.pop %v976
        %v978 = vmul.f32 %v913, 1.442695
        %v979 = vpow.pop %v978
        %v980 = vmul.f32 %v914, 1.442695
        %v981 = vpow.pop %v980
        %v982 = vmul.f32 %v915, 1.442695
        %v983 = vpow.pop %v982
        %v984 = vmul.f32 %v916, 1.442695
        %v985 = vpow.pop %v984
        %v986 = vmul.f32 %v917, 1.442695
        %v987 = vpow.pop %v986
        %v988 = vmul.f32 %v918, 1.442695
        %v989 = vpow.pop %v988
        %v990 = vmul.f32 %v919, 1.442695
        %v991 = vpow.pop %v990
        %v992 = vmul.f32 %v920, 1.442695
        %v993 = vpow.pop %v992
        %v994 = vmul.f32 %v921, 1.442695
        %v995 = vpow.pop %v994
        %v996 = vmul.f32 %v922, 1.442695
        %v997 = vpow.pop %v996
        %v998 = vmul.f32 %v923, 1.442695
        %v999 = vpow.pop %v998
        %v1000 = vmul.f32 %v924, 1.442695
        %v1001 = vpow.pop %v1000
        %v1002 = vmul.f32 %v925, 1.442695
        %v1003 = vpow.pop %v1002
        %v1004 = vmul.f32 %v926, 1.442695
        %v1005 = vpow.pop %v1004
        %v1006 = vmul.f32 %v927, 1.442695
        %v1007 = vpow.pop %v1006
        %v1008 = vmul.f32 %v928, 1.442695
        %v1009 = vpow.pop %v1008
        %v1010 = vmul.f32 %v929, 1.442695
        %v1011 = vpow.pop %v1010
        %v1012 = vmul.f32 %v930, 1.442695
        %v1013 = vpow.pop %v1012
        %v1014 = vmul.f32 %v931, 1.442695
        %v1015 = vpow.pop %v1014
        %v1016 = vmul.f32 %v932, 1.442695
        %v1017 = vpow.pop %v1016
        %v1018 = vmul.f32 %v933, 1.442695
        %v1019 = vpow.pop %v1018
        %v1020 = vmul.f32 %v934, 1.442695
        %v1021 = vpow.pop %v1020
        %v1022 = vmul.f32 %v935, 1.442695
        %v1023 = vpow.pop %v1022
        %v1024 = vmul.f32 %v936, 1.442695
        %v1025 = vpow.pop %v1024
        %v1026 = vmul.f32 %v937, 1.442695
        %v1027 = vpow.pop %v1026
        %v1028 = vmul.f32 %v938, 1.442695
        %v1029 = vpow.pop %v1028
        %v1030 = vmul.f32 %v939, 1.442695
        %v1031 = vpow.pop %v1030
        %v1032 = vmul.f32 %v940, 1.442695
        %v1033 = vpow.pop %v1032
        %v1034 = vmul.f32 %v941, 1.442695
        %v1035 = vpow.pop %v1034
        %v1036 = vmul.f32 %v942, 1.442695
        %v1037 = vpow.pop %v1036
        %v1038 = vmul.f32 %v943, 1.442695
        %v1039 = vpow.pop %v1038
        %v1040 = vmul.f32 %v944, 1.442695
        %v1041 = vpow.pop %v1040
        %v1042 = vmul.f32 %v945, 1.442695
        %v1043 = vpow.pop %v1042
        %v1044 = vmul.f32 %v946, 1.442695
        %v1045 = vpow.pop %v1044
        %v1046 = vmul.f32 %v947, 1.442695
        %v1047 = vpow.pop %v1046
        %v1048 = vmul.f32 %v948, 1.442695
        %v1049 = vpow.pop %v1048
        %v1050 = vmul.f32 %v949, 1.442695
        %v1051 = vpow.pop %v1050
        %v1052 = vmul.f32 %v950, 1.442695
        %v1053 = vpow.pop %v1052
        %v1054 = vmul.f32 %v951, 1.442695
        %v1055 = vpow.pop %v1054
        %v1056 = vmul.f32 %v952, 1.442695
        %v1057 = vpow.pop %v1056
        %v1058 = vmul.f32 %v953, 1.442695
        %v1059 = vpow.pop %v1058
        %v1060 = vmul.f32 %v954, 1.442695
        %v1061 = vpow.pop %v1060
        %v1062 = vmul.f32 %v955, 1.442695
        %v1063 = vpow.pop %v1062
        %v1064 = vmul.f32 %v956, 1.442695
        %v1065 = vpow.pop %v1064
        %v1066 = vmul.f32 %v957, 1.442695
        %v1067 = vpow.pop %v1066
        %v1068 = vmul.f32 %v958, 1.442695
        %v1069 = vpow.pop %v1068
        %v1070 = vmul.f32 %v959, 1.442695
        %v1071 = vpow.pop %v1070
        %v1072 = vmul.f32 %v960, 1.442695
        %v1073 = vpow.pop %v1072
        %v1074 = vmul.f32 %v961, 1.442695
        %v1075 = vpow.pop %v1074
        %v1076 = vmul.f32 %v962, 1.442695
        %v1077 = vpow.pop %v1076
        %v1078 = vmul.f32 %v963, 1.442695
        %v1079 = vpow.pop %v1078
        %v1080 = vmul.f32 %v964, 1.442695
        %v1081 = vpow.pop %v1080
        %v1082 = vmul.f32 %v965, 1.442695
        %v1083 = vpow.pop %v1082
        %v1084 = vmul.f32 %v966, 1.442695
        %v1085 = vpow.pop %v1084
        %v1086 = vmul.f32 %v967, 1.442695
        %v1087 = vpow.pop %v1086
        %v1088 = vmul.f32 %v968, 1.442695
        %v1089 = vpow.pop %v1088
        %v1090 = vmul.f32 %v969, 1.442695
        %v1091 = vpow.pop %v1090
        %v1092 = vmul.f32 %v970, 1.442695
        %v1093 = vpow.pop %v1092
        %v1094 = vmul.f32 %v971, 1.442695
        %v1095 = vpow.pop %v1094
        %v1096 = vmul.f32 %v972, 1.442695
        %v1097 = vpow.pop %v1096
        %v1098 = vmul.f32 %v973, 1.442695
        %v1099 = vpow.pop %v1098
        %v1100 = vmul.f32 %v974, 1.442695
        %v1101 = vpow.pop %v1100
        %v1102 = vmul.f32 %v975, 1.442695
        %v1103 = vpow.pop %v1102
        %v1104 = vadd.f32 %v977, %v979
        %1105 = vadd.xlane.f32.xlu0 %v1104
        %v1106 = vpop.xlane.xlu0 %1105
        %v1107 = vadd.f32 %v981, %v983
        %1108 = vadd.xlane.f32.xlu0 %v1107
        %v1109 = vpop.xlane.xlu0 %1108
        %v1110 = vadd.f32 %v985, %v987
        %1111 = vadd.xlane.f32.xlu0 %v1110
        %v1112 = vpop.xlane.xlu0 %1111
        %v1113 = vadd.f32 %v989, %v991
        %1114 = vadd.xlane.f32.xlu0 %v1113
        %v1115 = vpop.xlane.xlu0 %1114
        %v1116 = vadd.f32 %v993, %v995
        %1117 = vadd.xlane.f32.xlu0 %v1116
        %v1118 = vpop.xlane.xlu0 %1117
        %v1119 = vadd.f32 %v997, %v999
        %1120 = vadd.xlane.f32.xlu0 %v1119
        %v1121 = vpop.xlane.xlu0 %1120
        %v1122 = vadd.f32 %v1001, %v1003
        %1123 = vadd.xlane.f32.xlu0 %v1122
        %v1124 = vpop.xlane.xlu0 %1123
        %v1125 = vadd.f32 %v1005, %v1007
        %1126 = vadd.xlane.f32.xlu0 %v1125
        %v1127 = vpop.xlane.xlu0 %1126
        %v1128 = vadd.f32 %v1009, %v1011
        %1129 = vadd.xlane.f32.xlu0 %v1128
        %v1130 = vpop.xlane.xlu0 %1129
        %v1131 = vadd.f32 %v1013, %v1015
        %1132 = vadd.xlane.f32.xlu0 %v1131
        %v1133 = vpop.xlane.xlu0 %1132
        %v1134 = vadd.f32 %v1017, %v1019
        %1135 = vadd.xlane.f32.xlu0 %v1134
        %v1136 = vpop.xlane.xlu0 %1135
        %v1137 = vadd.f32 %v1021, %v1023
        %1138 = vadd.xlane.f32.xlu0 %v1137
        %v1139 = vpop.xlane.xlu0 %1138
        %v1140 = vadd.f32 %v1025, %v1027
        %1141 = vadd.xlane.f32.xlu0 %v1140
        %v1142 = vpop.xlane.xlu0 %1141
        %v1143 = vadd.f32 %v1029, %v1031
        %1144 = vadd.xlane.f32.xlu0 %v1143
        %v1145 = vpop.xlane.xlu0 %1144
        %v1146 = vadd.f32 %v1033, %v1035
        %1147 = vadd.xlane.f32.xlu0 %v1146
        %v1148 = vpop.xlane.xlu0 %1147
        %v1149 = vadd.f32 %v1037, %v1039
        %1150 = vadd.xlane.f32.xlu0 %v1149
        %v1151 = vpop.xlane.xlu0 %1150
        %v1152 = vadd.f32 %v1041, %v1043
        %1153 = vadd.xlane.f32.xlu0 %v1152
        %v1154 = vpop.xlane.xlu0 %1153
        %v1155 = vadd.f32 %v1045, %v1047
        %1156 = vadd.xlane.f32.xlu0 %v1155
        %v1157 = vpop.xlane.xlu0 %1156
        %v1158 = vadd.f32 %v1049, %v1051
        %1159 = vadd.xlane.f32.xlu0 %v1158
        %v1160 = vpop.xlane.xlu0 %1159
        %v1161 = vadd.f32 %v1053, %v1055
        %1162 = vadd.xlane.f32.xlu0 %v1161
        %v1163 = vpop.xlane.xlu0 %1162
        %v1164 = vadd.f32 %v1057, %v1059
        %1165 = vadd.xlane.f32.xlu0 %v1164
        %v1166 = vpop.xlane.xlu0 %1165
        %v1167 = vadd.f32 %v1061, %v1063
        %1168 = vadd.xlane.f32.xlu0 %v1167
        %v1169 = vpop.xlane.xlu0 %1168
        %v1170 = vadd.f32 %v1065, %v1067
        %1171 = vadd.xlane.f32.xlu0 %v1170
        %v1172 = vpop.xlane.xlu0 %1171
        %v1173 = vadd.f32 %v1069, %v1071
        %1174 = vadd.xlane.f32.xlu0 %v1173
        %v1175 = vpop.xlane.xlu0 %1174
        %v1176 = vadd.f32 %v1073, %v1075
        %1177 = vadd.xlane.f32.xlu0 %v1176
        %v1178 = vpop.xlane.xlu0 %1177
        %v1179 = vadd.f32 %v1077, %v1079
        %1180 = vadd.xlane.f32.xlu0 %v1179
        %v1181 = vpop.xlane.xlu0 %1180
        %v1182 = vadd.f32 %v1081, %v1083
        %1183 = vadd.xlane.f32.xlu0 %v1182
        %v1184 = vpop.xlane.xlu0 %1183
        %v1185 = vadd.f32 %v1085, %v1087
        %1186 = vadd.xlane.f32.xlu0 %v1185
        %v1187 = vpop.xlane.xlu0 %1186
        %v1188 = vadd.f32 %v1089, %v1091
        %1189 = vadd.xlane.f32.xlu0 %v1188
        %v1190 = vpop.xlane.xlu0 %1189
        %v1191 = vadd.f32 %v1093, %v1095
        %1192 = vadd.xlane.f32.xlu0 %v1191
        %v1193 = vpop.xlane.xlu0 %1192
        %v1194 = vadd.f32 %v1097, %v1099
        %1195 = vadd.xlane.f32.xlu0 %v1194
        %v1196 = vpop.xlane.xlu0 %1195
        %v1197 = vadd.f32 %v1101, %v1103
        %1198 = vadd.xlane.f32.xlu0 %v1197
        %v1199 = vpop.xlane.xlu0 %1198
        %v1200 = vrcp.pop %v1106
        %v1201 = vrcp.pop %v1109
        %v1202 = vrcp.pop %v1112
        %v1203 = vrcp.pop %v1115
        %v1204 = vrcp.pop %v1118
        %v1205 = vrcp.pop %v1121
        %v1206 = vrcp.pop %v1124
        %v1207 = vrcp.pop %v1127
        %v1208 = vrcp.pop %v1130
        %v1209 = vrcp.pop %v1133
        %v1210 = vrcp.pop %v1136
        %v1211 = vrcp.pop %v1139
        %v1212 = vrcp.pop %v1142
        %v1213 = vrcp.pop %v1145
        %v1214 = vrcp.pop %v1148
        %v1215 = vrcp.pop %v1151
        %v1216 = vrcp.pop %v1154
        %v1217 = vrcp.pop %v1157
        %v1218 = vrcp.pop %v1160
        %v1219 = vrcp.pop %v1163
        %v1220 = vrcp.pop %v1166
        %v1221 = vrcp.pop %v1169
        %v1222 = vrcp.pop %v1172
        %v1223 = vrcp.pop %v1175
        %v1224 = vrcp.pop %v1178
        %v1225 = vrcp.pop %v1181
        %v1226 = vrcp.pop %v1184
        %v1227 = vrcp.pop %v1187
        %v1228 = vrcp.pop %v1190
        %v1229 = vrcp.pop %v1193
        %v1230 = vrcp.pop %v1196
        %v1231 = vrcp.pop %v1199
        %v1232 = vmul.f32 %v977, %v1200
        %v1233 = vmul.f32 %v979, %v1200
        %v1234 = vmul.f32 %v981, %v1201
        %v1235 = vmul.f32 %v983, %v1201
        %v1236 = vmul.f32 %v985, %v1202
        %v1237 = vmul.f32 %v987, %v1202
        %v1238 = vmul.f32 %v989, %v1203
        %v1239 = vmul.f32 %v991, %v1203
        %v1240 = vmul.f32 %v993, %v1204
        %v1241 = vmul.f32 %v995, %v1204
        %v1242 = vmul.f32 %v997, %v1205
        %v1243 = vmul.f32 %v999, %v1205
        %v1244 = vmul.f32 %v1001, %v1206
        %v1245 = vmul.f32 %v1003, %v1206
        %v1246 = vmul.f32 %v1005, %v1207
        %v1247 = vmul.f32 %v1007, %v1207
        %v1248 = vmul.f32 %v1009, %v1208
        %v1249 = vmul.f32 %v1011, %v1208
        %v1250 = vmul.f32 %v1013, %v1209
        %v1251 = vmul.f32 %v1015, %v1209
        %v1252 = vmul.f32 %v1017, %v1210
        %v1253 = vmul.f32 %v1019, %v1210
        %v1254 = vmul.f32 %v1021, %v1211
        %v1255 = vmul.f32 %v1023, %v1211
        %v1256 = vmul.f32 %v1025, %v1212
        %v1257 = vmul.f32 %v1027, %v1212
        %v1258 = vmul.f32 %v1029, %v1213
        %v1259 = vmul.f32 %v1031, %v1213
        %v1260 = vmul.f32 %v1033, %v1214
        %v1261 = vmul.f32 %v1035, %v1214
        %v1262 = vmul.f32 %v1037, %v1215
        %v1263 = vmul.f32 %v1039, %v1215
        %v1264 = vmul.f32 %v1041, %v1216
        %v1265 = vmul.f32 %v1043, %v1216
        %v1266 = vmul.f32 %v1045, %v1217
        %v1267 = vmul.f32 %v1047, %v1217
        %v1268 = vmul.f32 %v1049, %v1218
        %v1269 = vmul.f32 %v1051, %v1218
        %v1270 = vmul.f32 %v1053, %v1219
        %v1271 = vmul.f32 %v1055, %v1219
        %v1272 = vmul.f32 %v1057, %v1220
        %v1273 = vmul.f32 %v1059, %v1220
        %v1274 = vmul.f32 %v1061, %v1221
        %v1275 = vmul.f32 %v1063, %v1221
        %v1276 = vmul.f32 %v1065, %v1222
        %v1277 = vmul.f32 %v1067, %v1222
        %v1278 = vmul.f32 %v1069, %v1223
        %v1279 = vmul.f32 %v1071, %v1223
        %v1280 = vmul.f32 %v1073, %v1224
        %v1281 = vmul.f32 %v1075, %v1224
        %v1282 = vmul.f32 %v1077, %v1225
        %v1283 = vmul.f32 %v1079, %v1225
        %v1284 = vmul.f32 %v1081, %v1226
        %v1285 = vmul.f32 %v1083, %v1226
        %v1286 = vmul.f32 %v1085, %v1227
        %v1287 = vmul.f32 %v1087, %v1227
        %v1288 = vmul.f32 %v1089, %v1228
        %v1289 = vmul.f32 %v1091, %v1228
        %v1290 = vmul.f32 %v1093, %v1229
        %v1291 = vmul.f32 %v1095, %v1229
        %v1292 = vmul.f32 %v1097, %v1230
        %v1293 = vmul.f32 %v1099, %v1230
        %v1294 = vmul.f32 %v1101, %v1231
        %v1295 = vmul.f32 %v1103, %v1231
        %v1296 = vld [vmem:[#allocation2] sm:$0xff]
        %v1297 = vld [vmem:[#allocation2 + $0x8] sm:$0xff]
        %v1298 = vld [vmem:[#allocation2 + $0x10] sm:$0xff]
        %v1299 = vld [vmem:[#allocation2 + $0x18] sm:$0xff]
        %1300 = vmatpush.xpose.msra.mxu0 %v1262
        %1301 = vmatpush.xpose.msra.mxu0 %v1260
        %1302 = vmatpush.xpose.msra.mxu0 %v1258
        %1303 = vmatpush.xpose.msra.mxu0 %v1256
        %1304 = vmatpush.xpose.msra.mxu0 %v1254
        %1305 = vmatpush.xpose.msra.mxu0 %v1252
        %1306 = vmatpush.xpose.msra.mxu0 %v1250
        %1307 = vmatpush.xpose.msra.mxu0 %v1248
        %1308 = vmatpush.xpose.msra.mxu0 %v1246
        %1309 = vmatpush.xpose.msra.mxu0 %v1244
        %1310 = vmatpush.xpose.msra.mxu0 %v1242
        %1311 = vmatpush.xpose.msra.mxu0 %v1240
        %1312 = vmatpush.xpose.msra.mxu0 %v1238
        %1313 = vmatpush.xpose.msra.mxu0 %v1236
        %1314 = vmatpush.xpose.msra.mxu0 %v1234
        %1315 = vmatpush.xpose.msra.mxu0 %v1232
        %1316 = vmatmul.f32.gmra.mxu0 %v1296
        %v1317 = vpop.f32.mrf.mxu0
        %v1318 = vadd.f32 0.0, %v1317
        %1319 = vmatmul.f32.gmra.mxu0 %v1298
        %v1320 = vpop.f32.mrf.mxu0
        %v1321 = vadd.f32 0.0, %v1320
        %1322 = vdwg.mxu0
        %1323 = vmatpush.xpose.msra.mxu0 %v1263
        %1324 = vmatpush.xpose.msra.mxu0 %v1261
        %1325 = vmatpush.xpose.msra.mxu0 %v1259
        %1326 = vmatpush.xpose.msra.mxu0 %v1257
        %1327 = vmatpush.xpose.msra.mxu0 %v1255
        %1328 = vmatpush.xpose.msra.mxu0 %v1253
        %1329 = vmatpush.xpose.msra.mxu0 %v1251
        %1330 = vmatpush.xpose.msra.mxu0 %v1249
        %1331 = vmatpush.xpose.msra.mxu0 %v1247
        %1332 = vmatpush.xpose.msra.mxu0 %v1245
        %1333 = vmatpush.xpose.msra.mxu0 %v1243
        %1334 = vmatpush.xpose.msra.mxu0 %v1241
        %1335 = vmatpush.xpose.msra.mxu0 %v1239
        %1336 = vmatpush.xpose.msra.mxu0 %v1237
        %1337 = vmatpush.xpose.msra.mxu0 %v1235
        %1338 = vmatpush.xpose.msra.mxu0 %v1233
        %1339 = vmatmul.f32.gmra.mxu0 %v1297
        %v1340 = vpop.f32.mrf.mxu0
        %v1341 = vadd.f32 %v1318, %v1340
        %1342 = vmatmul.f32.gmra.mxu0 %v1299
        %v1343 = vpop.f32.mrf.mxu0
        %v1344 = vadd.f32 %v1321, %v1343
        %1345 = vdwg.mxu0
        %1346 = vmatpush.xpose.msra.mxu0 %v1294
        %1347 = vmatpush.xpose.msra.mxu0 %v1292
        %1348 = vmatpush.xpose.msra.mxu0 %v1290
        %1349 = vmatpush.xpose.msra.mxu0 %v1288
        %1350 = vmatpush.xpose.msra.mxu0 %v1286
        %1351 = vmatpush.xpose.msra.mxu0 %v1284
        %1352 = vmatpush.xpose.msra.mxu0 %v1282
        %1353 = vmatpush.xpose.msra.mxu0 %v1280
        %1354 = vmatpush.xpose.msra.mxu0 %v1278
        %1355 = vmatpush.xpose.msra.mxu0 %v1276
        %1356 = vmatpush.xpose.msra.mxu0 %v1274
        %1357 = vmatpush.xpose.msra.mxu0 %v1272
        %1358 = vmatpush.xpose.msra.mxu0 %v1270
        %1359 = vmatpush.xpose.msra.mxu0 %v1268
        %1360 = vmatpush.xpose.msra.mxu0 %v1266
        %1361 = vmatpush.xpose.msra.mxu0 %v1264
        %1362 = vmatmul.f32.gmra.mxu0 %v1296
        %v1363 = vpop.f32.mrf.mxu0
        %v1364 = vadd.f32 0.0, %v1363
        %1365 = vmatmul.f32.gmra.mxu0 %v1298
        %v1366 = vpop.f32.mrf.mxu0
        %v1367 = vadd.f32 0.0, %v1366
        %1368 = vdwg.mxu0
        %1369 = vmatpush.xpose.msra.mxu0 %v1295
        %1370 = vmatpush.xpose.msra.mxu0 %v1293
        %1371 = vmatpush.xpose.msra.mxu0 %v1291
        %1372 = vmatpush.xpose.msra.mxu0 %v1289
        %1373 = vmatpush.xpose.msra.mxu0 %v1287
        %1374 = vmatpush.xpose.msra.mxu0 %v1285
        %1375 = vmatpush.xpose.msra.mxu0 %v1283
        %1376 = vmatpush.xpose.msra.mxu0 %v1281
        %1377 = vmatpush.xpose.msra.mxu0 %v1279
        %1378 = vmatpush.xpose.msra.mxu0 %v1277
        %1379 = vmatpush.xpose.msra.mxu0 %v1275
        %1380 = vmatpush.xpose.msra.mxu0 %v1273
        %1381 = vmatpush.xpose.msra.mxu0 %v1271
        %1382 = vmatpush.xpose.msra.mxu0 %v1269
        %1383 = vmatpush.xpose.msra.mxu0 %v1267
        %1384 = vmatpush.xpose.msra.mxu0 %v1265
        %1385 = vmatmul.f32.gmra.mxu0 %v1297
        %v1386 = vpop.f32.mrf.mxu0
        %v1387 = vadd.f32 %v1364, %v1386
        %1388 = vmatmul.f32.gmra.mxu0 %v1299
        %v1389 = vpop.f32.mrf.mxu0
        %v1390 = vadd.f32 %v1367, %v1389
        %1391 = vdwg.mxu0
        %s1392 = sld [smem:[#allocation3]]
        %v1393 = vstv %s1392
        %v1394 = vmul.f32 %v1393, %v1341
        %v1395 = vmul.f32 %v1393, %v1387
        %v1396 = vmul.f32 %v1393, %v1344
        %v1397 = vmul.f32 %v1393, %v1390
        %v1398 = vadd.f32 %v1394, %v355
        %v1399 = vadd.f32 %v1395, %v356
        %v1400 = vadd.f32 %v1396, %v357
        %v1401 = vadd.f32 %v1397, %v358
        %1402 = vst [vmem:[%s269] sm:$0xff] %v1398
        %1403 = vst [vmem:[%s269 + $0x8] sm:$0xff] %v1399
        %1404 = vst [vmem:[%s269 + $0x10] sm:$0xff] %v1400
        %1405 = vst [vmem:[%s269 + $0x18] sm:$0xff] %v1401
        %s1406 = sand.u32 %s175, 1
        %s1407 = scalar_lea.sflag [#allocation6], %s1406
        %s1408 = sand.u32 %s175, 1
        %s1409 = smul.addr %s1408, 32
        %s1410 = scalar_lea.vmem [#allocation7], %s1409
        // Predicated region
        $region53: #{tpu_custom_call.1} parent=43 // pred_check
          %p1411 = pneg %p185
        $region54: #{tpu_custom_call.1} parent=43 // pred_check_branch
          %1413 = sbr.rel (%p1411) target = $region56
        $region55: #{tpu_custom_call.1} parent=43 // pred_region
          %s1414 = smul.u32 2, %s27
          %1416 = vsyncadd %s1407, 0
          %s1417 = smul.addr %s26, 4
          %s1418 = sadd.s32 %s1414, %s1417
          %s1419 = smul.addr %s1418, 8
          %s1420 = scalar_lea.hbm %s6, %s1419
          %s1421 = sshll.u32 %s1410, 4
          %s1422 = int_to_ptr.vmem [resolvable:$true] %s1421
          %s1423 = sshll.u32 %s1420, 4
          %s1424 = int_to_ptr.hbm [resolvable:$true] %s1423
          %1429 = dma.vmem_to_hbm [thread:$0]  %s1422, 512, %s1424, %s1407, 256, 256, 16
        $region56: #{tpu_custom_call.1} parent=43 // pred_fallthru
          _
      $region44: #{tpu_custom_call.1} parent=5 // pred_fallthru
        _
      %p1430 = scmp.le.s32.totalorder 2, %s17
      // Predicated region
      $region57: #{tpu_custom_call.1} parent=5 // pred_check
        %p1431 = pneg %p1430
      $region58: #{tpu_custom_call.1} parent=5 // pred_check_branch
        %1433 = sbr.rel (%p1431) target = $region60
      $region59: #{tpu_custom_call.1} parent=5 // pred_region
        %s1434 = ssub.s32 %s17, 2
        // Predicated region
        $region61: #{tpu_custom_call.1} parent=59 // pred_check
          %p1435 = pneg %p191
        $region62: #{tpu_custom_call.1} parent=59 // pred_check_branch
          %1437 = sbr.rel (%p1435) target = $region64
        $region63: #{tpu_custom_call.1} parent=59 // pred_region
          %s1438 = sand.u32 %s176, 1
          %s1439 = scalar_lea.sflag [#allocation6], %s1438
          %s1440 = sand.u32 %s176, 1
          %s1441 = smul.addr %s1440, 32
          %s1442 = scalar_lea.vmem [#allocation7], %s1441
          %1444 = dma.done %s1439, 512
        $region64: #{tpu_custom_call.1} parent=59 // pred_fallthru
          _
      $region60: #{tpu_custom_call.1} parent=5 // pred_fallthru
        _
    $region6: #{tpu_custom_call.1} parent=1 // loop_footer
      %s21 = sadd.s32 1, %s17
    $region7: #{tpu_custom_call.1} parent=1 // loop_footer_branch
      %16 = sbr.rel target = $region3
    $region8: #{tpu_custom_call.1} parent=1 // loop_exit
      _
    %1445 = vsyncpa [#allocation5], 1
    %s1446 = scalar_lea.sflag [#allocation5], 1
    %1447 = vsyncpa %s1446, 1
    %1448 = vsyncpa [#allocation6], 1
    %s1449 = scalar_lea.sflag [#allocation6], 1
    %1450 = vsyncpa %s1449, 1

</llo_original>
